<compile_context>
chip_gen: v5e
topology: v5e:2x2
jax: 0.10.0
libtpu: 0.0.40
codegen_flags: <defaults>
</compile_context>

<pallas_src>
import functools

import jax
import jax.numpy as jnp
from jax.experimental import pallas as pl
from jax.experimental.pallas import tpu as pltpu

INPUT_SIZE = 2
HIDDEN_SIZE = 64
OUTPUT_SIZE = 2


def _sigmoid(x):
    # One EUP op (tanh); mathematically identical to the logistic sigmoid.
    return 0.5 * jnp.tanh(0.5 * x) + 0.5


def _lstm_cell_model_kernel(
    horizon, T, B, H, HP, O, I, fc_row,
    x_ref,      # (T, B, I)          time-major ground-truth inputs
    w_ref,      # (2, HP, 4*HP)      [0]=W_hh^T padded, [1]=fused feedback weight
    misc_ref,   # (fc_row+HP, 4*HP)  rows 0..I-1: W_ih^T, I: b, I+1: b_fb,
                #                    I+2 (cols<O): b_fc, fc_row..: W_fc^T (cols<O)
    out_ref,    # (T, B, O)
):
    wh = w_ref[0]                               # (HP, 4HP)
    wfb = w_ref[1]                              # (HP, 4HP)
    bfb = misc_ref[I + 1:I + 2, :]              # (1, 4HP)
    bfc = misc_ref[I + 2:I + 3, 0:O]            # (1, O)
    wfc = misc_ref[fc_row:fc_row + HP, 0:O]     # (HP, O)

    hx = jnp.zeros((B, HP), jnp.float32)
    cx = jnp.zeros((B, HP), jnp.float32)

    # Static unroll over time; hx/cx and all per-step values stay in vregs.
    for t in range(T):
        if t % horizon == 0:
            # Ground-truth step: x-path via VPU broadcast-FMAs (no K=2 matmul).
            x_t = x_ref[t]                                  # (B, I)
            gates = misc_ref[I:I + 1, :]                    # bias (1, 4HP)
            for c in range(I):
                gates = gates + x_t[:, c:c + 1] * misc_ref[c:c + 1, :]
            if t > 0:
                gates = gates + jnp.dot(hx, wh,
                                        preferred_element_type=jnp.float32)
        else:
            # Feedback step: fc(h) algebraically folded into the gate weights.
            gates = bfb + jnp.dot(hx, wfb, preferred_element_type=jnp.float32)

        # 128-lane-aligned gate slices (padded lanes stay exactly zero).
        i_g = _sigmoid(gates[:, 0 * HP:1 * HP])
        f_g = _sigmoid(gates[:, 1 * HP:2 * HP])
        g_g = jnp.tanh(gates[:, 2 * HP:3 * HP])
        o_g = _sigmoid(gates[:, 3 * HP:4 * HP])

        cx = f_g * cx + i_g * g_g
        hx = o_g * jnp.tanh(cx)

        # fc output; off the recurrence chain (nothing downstream consumes it).
        out_t = jnp.dot(hx, wfc, preferred_element_type=jnp.float32) + bfc
        out_ref[t] = out_t.astype(out_ref.dtype)


@functools.partial(jax.jit, static_argnums=(2,))
def lstm_cell_model_forward(x, params, horizon):
    """x: (B, T, input_size) float32.  Returns (B, T, output_size)."""
    B, T, I = x.shape
    H = params["w_hh"].shape[1]
    O = params["w_fc"].shape[0]
    assert I == O, "feedback path requires output_size == input_size"

    f32 = jnp.float32
    HP = -(-H // 128) * 128          # gate group padded to a 128-lane boundary
    G4 = 4 * HP

    w_ih = params["w_ih"].astype(f32)                        # (4H, I)
    w_hh = params["w_hh"].astype(f32)                        # (4H, H)
    b_g = (params["b_ih"] + params["b_hh"]).astype(f32)      # (4H,)
    w_fc = params["w_fc"].astype(f32)                        # (O, H)
    b_fc = params["b_fc"].astype(f32)                        # (O,)

    def pad_gate_cols(m):
        # (K, 4H) with columns [i|f|g|o] (H each) -> (K, 4HP); each gate block
        # starts at a 128-lane boundary, padding columns are zero.
        out = jnp.zeros((m.shape[0], G4), f32)
        for g in range(4):
            out = out.at[:, g * HP:g * HP + H].set(m[:, g * H:(g + 1) * H])
        return out

    def pad_rows(m, rows):
        return jnp.zeros((rows, m.shape[1]), f32).at[:m.shape[0], :].set(m)

    wx = pad_gate_cols(w_ih.T)                               # (I, 4HP)
    wh = pad_gate_cols(w_hh.T)                               # (H, 4HP)
    bg = pad_gate_cols(b_g.reshape(1, 4 * H))                # (1, 4HP)

    # Feedback-step fusion:
    #   gates = (h @ W_fc^T + b_fc) @ W_ih^T + h @ W_hh^T + b
    #         = h @ (W_fc^T @ W_ih^T + W_hh^T) + (b_fc @ W_ih^T + b)
    w_fb = pad_gate_cols(w_fc.T @ w_ih.T) + wh               # (H, 4HP)
    b_fb = pad_gate_cols((b_fc @ w_ih.T).reshape(1, 4 * H)) + bg   # (1, 4HP)

    # Slab 1: recurrence weights (rows padded H -> HP; hx carries HP lanes).
    w_slab = jnp.stack([pad_rows(wh, HP), pad_rows(w_fb, HP)], axis=0)  # (2,HP,4HP)

    # Slab 2: everything small (x-path weights, biases, fc weight) -> one DMA.
    fc_row = -(-(I + 3) // 8) * 8
    misc = jnp.zeros((fc_row + HP, G4), f32)
    misc = misc.at[0:I, :].set(wx)
    misc = misc.at[I, :].set(bg[0])
    misc = misc.at[I + 1, :].set(b_fb[0])
    misc = misc.at[I + 2, 0:O].set(b_fc)
    misc = misc.at[fc_row:fc_row + H, 0:O].set(w_fc.T)

    x_tm = jnp.transpose(x, (1, 0, 2)).astype(f32)           # (T, B, I)

    kernel = functools.partial(
        _lstm_cell_model_kernel, horizon, T, B, H, HP, O, I, fc_row)
    vmem = lambda: pl.BlockSpec(memory_space=pltpu.MemorySpace.VMEM)

    out = pl.pallas_call(
        kernel,
        out_shape=jax.ShapeDtypeStruct((T, B, O), f32),
        in_specs=[vmem(), vmem(), vmem()],
        out_specs=vmem(),
    )(x_tm, w_slab, misc)

    return jnp.transpose(out, (1, 0, 2))                     # (B, T, O)


def _reference_forward(x, params, horizon):
    """Pure-JAX reference mirroring the PyTorch loop (for a sanity check)."""
    B, T, _ = x.shape
    H = params["w_hh"].shape[1]
    hx = jnp.zeros((B, H), jnp.float32)
    cx = jnp.zeros((B, H), jnp.float32)
    outs = []
    for i in range(T):
        inp = x[:, i, :] if i % horizon == 0 else outs[-1]
        gates = (inp @ params["w_ih"].T + params["b_ih"]
                 + hx @ params["w_hh"].T + params["b_hh"])
        i_g = jax.nn.sigmoid(gates[:, 0 * H:1 * H])
        f_g = jax.nn.sigmoid(gates[:, 1 * H:2 * H])
        g_g = jnp.tanh(gates[:, 2 * H:3 * H])
        o_g = jax.nn.sigmoid(gates[:, 3 * H:4 * H])
        cx = f_g * cx + i_g * g_g
        hx = o_g * jnp.tanh(cx)
        outs.append(hx @ params["w_fc"].T + params["b_fc"])
    return jnp.stack(outs, axis=1)


def init_params(key, input_size, hidden_size, output_size):
    """Deterministic init matching PyTorch parameter shapes (uniform +/- 1/sqrt(H))."""
    ks = jax.random.split(key, 6)
    bound = 1.0 / jnp.sqrt(hidden_size)
    u = lambda k, shape, b: jax.random.uniform(k, shape, jnp.float32, -b, b)
    return {
        "w_ih": u(ks[0], (4 * hidden_size, input_size), bound),
        "w_hh": u(ks[1], (4 * hidden_size, hidden_size), bound),
        "b_ih": u(ks[2], (4 * hidden_size,), bound),
        "b_hh": u(ks[3], (4 * hidden_size,), bound),
        "w_fc": u(ks[4], (output_size, hidden_size), bound),
        "b_fc": u(ks[5], (output_size,), bound),
    }


if __name__ == "__main__":
    key = jax.random.PRNGKey(0)
    k_param, k_x = jax.random.split(key)

    B, T = 2, 8
    horizon = 3

    params = init_params(k_param, INPUT_SIZE, HIDDEN_SIZE, OUTPUT_SIZE)
    x = jax.random.normal(k_x, (B, T, INPUT_SIZE), jnp.float32)

    out = jax.block_until_ready(lstm_cell_model_forward(x, params, horizon))
    ref = jax.block_until_ready(_reference_forward(x, params, horizon))

    assert out.shape == (B, T, OUTPUT_SIZE)
    max_err = float(jnp.max(jnp.abs(out - ref)))
    assert jnp.allclose(out, ref, atol=1e-4, rtol=1e-4), max_err

    print("KERNEL_OK")
</pallas_src>

<mosaic_0001>
module attributes {stable_mosaic.version = 11 : i64} {
  func.func @_lstm_cell_model_kernel(%arg0: memref<8x2x2xf32, #tpu.memory_space<vmem>>, %arg1: memref<2x128x512xf32, #tpu.memory_space<vmem>>, %arg2: memref<136x512xf32, #tpu.memory_space<vmem>>, %arg3: memref<8x2x2xf32, #tpu.memory_space<vmem>>) attributes {dimension_semantics = [], scalar_prefetch = 0 : i64, scratch_operands = 0 : i64, tpu.core_type = #tpu.core_type<tc>} {
    %c0 = arith.constant 0 : index
    %c0_0 = arith.constant 0 : index
    %c0_1 = arith.constant 0 : index
    %0 = vector.load %arg1[%c0, %c0_0, %c0_1] : memref<2x128x512xf32, #tpu.memory_space<vmem>>, vector<1x128x512xf32>
    %1 = vector.shape_cast %0 : vector<1x128x512xf32> to vector<128x512xf32>
    %c1 = arith.constant 1 : index
    %c0_2 = arith.constant 0 : index
    %c0_3 = arith.constant 0 : index
    %2 = vector.load %arg1[%c1, %c0_2, %c0_3] : memref<2x128x512xf32, #tpu.memory_space<vmem>>, vector<1x128x512xf32>
    %3 = vector.shape_cast %2 : vector<1x128x512xf32> to vector<128x512xf32>
    %c3 = arith.constant 3 : index
    %c0_4 = arith.constant 0 : index
    %4 = vector.load %arg2[%c3, %c0_4] : memref<136x512xf32, #tpu.memory_space<vmem>>, vector<1x512xf32>
    %c4 = arith.constant 4 : index
    %c0_5 = arith.constant 0 : index
    %5 = vector.load %arg2[%c4, %c0_5] : memref<136x512xf32, #tpu.memory_space<vmem>>, vector<1x2xf32>
    %c8 = arith.constant 8 : index
    %c0_6 = arith.constant 0 : index
    %6 = vector.load %arg2[%c8, %c0_6] : memref<136x512xf32, #tpu.memory_space<vmem>>, vector<128x2xf32>
    %cst = arith.constant 0.000000e+00 : f32
    %7 = vector.broadcast %cst : f32 to vector<2x128xf32>
    %c0_7 = arith.constant 0 : index
    %c0_8 = arith.constant 0 : index
    %c0_9 = arith.constant 0 : index
    %8 = vector.load %arg0[%c0_7, %c0_8, %c0_9] : memref<8x2x2xf32, #tpu.memory_space<vmem>>, vector<1x2x2xf32>
    %9 = vector.shape_cast %8 : vector<1x2x2xf32> to vector<2x2xf32>
    %c2 = arith.constant 2 : index
    %c0_10 = arith.constant 0 : index
    %10 = vector.load %arg2[%c2, %c0_10] : memref<136x512xf32, #tpu.memory_space<vmem>>, vector<1x512xf32>
    %11 = vector.extract_strided_slice %9 {offsets = [0, 0], sizes = [2, 1], strides = [1, 1]} : vector<2x2xf32> to vector<2x1xf32>
    %c0_11 = arith.constant 0 : index
    %c0_12 = arith.constant 0 : index
    %12 = vector.load %arg2[%c0_11, %c0_12] : memref<136x512xf32, #tpu.memory_space<vmem>>, vector<1x512xf32>
    %13 = vector.broadcast %11 : vector<2x1xf32> to vector<2x512xf32>
    %14 = vector.broadcast %12 : vector<1x512xf32> to vector<2x512xf32>
    %15 = arith.mulf %13, %14 : vector<2x512xf32>
    %16 = vector.broadcast %10 : vector<1x512xf32> to vector<2x512xf32>
    %17 = arith.addf %16, %15 : vector<2x512xf32>
    %18 = vector.extract_strided_slice %9 {offsets = [0, 1], sizes = [2, 1], strides = [1, 1]} : vector<2x2xf32> to vector<2x1xf32>
    %c1_13 = arith.constant 1 : index
    %c0_14 = arith.constant 0 : index
    %19 = vector.load %arg2[%c1_13, %c0_14] : memref<136x512xf32, #tpu.memory_space<vmem>>, vector<1x512xf32>
    %20 = vector.broadcast %18 : vector<2x1xf32> to vector<2x512xf32>
    %21 = vector.broadcast %19 : vector<1x512xf32> to vector<2x512xf32>
    %22 = arith.mulf %20, %21 : vector<2x512xf32>
    %23 = arith.addf %17, %22 : vector<2x512xf32>
    %24 = vector.extract_strided_slice %23 {offsets = [0, 0], sizes = [2, 128], strides = [1, 1]} : vector<2x512xf32> to vector<2x128xf32>
    %cst_15 = arith.constant 5.000000e-01 : f32
    %25 = vector.broadcast %cst_15 : f32 to vector<2x128xf32>
    %26 = arith.mulf %25, %24 : vector<2x128xf32>
    %27 = math.tanh %26 : vector<2x128xf32>
    %cst_16 = arith.constant 5.000000e-01 : f32
    %28 = vector.broadcast %cst_16 : f32 to vector<2x128xf32>
    %29 = arith.mulf %28, %27 : vector<2x128xf32>
    %cst_17 = arith.constant 5.000000e-01 : f32
    %30 = vector.broadcast %cst_17 : f32 to vector<2x128xf32>
    %31 = arith.addf %29, %30 : vector<2x128xf32>
    %32 = vector.extract_strided_slice %23 {offsets = [0, 128], sizes = [2, 128], strides = [1, 1]} : vector<2x512xf32> to vector<2x128xf32>
    %cst_18 = arith.constant 5.000000e-01 : f32
    %33 = vector.broadcast %cst_18 : f32 to vector<2x128xf32>
    %34 = arith.mulf %33, %32 : vector<2x128xf32>
    %35 = math.tanh %34 : vector<2x128xf32>
    %cst_19 = arith.constant 5.000000e-01 : f32
    %36 = vector.broadcast %cst_19 : f32 to vector<2x128xf32>
    %37 = arith.mulf %36, %35 : vector<2x128xf32>
    %cst_20 = arith.constant 5.000000e-01 : f32
    %38 = vector.broadcast %cst_20 : f32 to vector<2x128xf32>
    %39 = arith.addf %37, %38 : vector<2x128xf32>
    %40 = vector.extract_strided_slice %23 {offsets = [0, 256], sizes = [2, 128], strides = [1, 1]} : vector<2x512xf32> to vector<2x128xf32>
    %41 = math.tanh %40 : vector<2x128xf32>
    %42 = vector.extract_strided_slice %23 {offsets = [0, 384], sizes = [2, 128], strides = [1, 1]} : vector<2x512xf32> to vector<2x128xf32>
    %cst_21 = arith.constant 5.000000e-01 : f32
    %43 = vector.broadcast %cst_21 : f32 to vector<2x128xf32>
    %44 = arith.mulf %43, %42 : vector<2x128xf32>
    %45 = math.tanh %44 : vector<2x128xf32>
    %cst_22 = arith.constant 5.000000e-01 : f32
    %46 = vector.broadcast %cst_22 : f32 to vector<2x128xf32>
    %47 = arith.mulf %46, %45 : vector<2x128xf32>
    %cst_23 = arith.constant 5.000000e-01 : f32
    %48 = vector.broadcast %cst_23 : f32 to vector<2x128xf32>
    %49 = arith.addf %47, %48 : vector<2x128xf32>
    %50 = arith.mulf %39, %7 : vector<2x128xf32>
    %51 = arith.mulf %31, %41 : vector<2x128xf32>
    %52 = arith.addf %50, %51 : vector<2x128xf32>
    %53 = math.tanh %52 : vector<2x128xf32>
    %54 = arith.mulf %49, %53 : vector<2x128xf32>
    %cst_24 = arith.constant dense<0.000000e+00> : vector<2x2xf32>
    %55 = tpu.matmul %54, %6, %cst_24 {dimension_numbers = #tpu.dot_dimension_numbers<[1], [0], [0], [1], [0, 0, 1, 1], [], []>} : vector<2x128xf32>, vector<128x2xf32>, vector<2x2xf32> -> vector<2x2xf32>
    %56 = vector.broadcast %5 : vector<1x2xf32> to vector<2x2xf32>
    %57 = arith.addf %55, %56 : vector<2x2xf32>
    %c0_25 = arith.constant 0 : index
    %c0_26 = arith.constant 0 : index
    %c0_27 = arith.constant 0 : index
    %58 = vector.load %arg3[%c0_25, %c0_26, %c0_27] : memref<8x2x2xf32, #tpu.memory_space<vmem>>, vector<1x2x2xf32>
    %59 = vector.shape_cast %58 : vector<1x2x2xf32> to vector<2x2xf32>
    %60 = vector.shape_cast %57 : vector<2x2xf32> to vector<1x2x2xf32>
    tpu.vector_store %arg3[%c0_25, %c0_26, %c0_27], %60 {strides = array<i32>} : memref<8x2x2xf32, #tpu.memory_space<vmem>>, vector<1x2x2xf32>,
    %cst_28 = arith.constant dense<0.000000e+00> : vector<2x512xf32>
    %61 = tpu.matmul %54, %3, %cst_28 {dimension_numbers = #tpu.dot_dimension_numbers<[1], [0], [0], [1], [0, 0, 1, 1], [], []>} : vector<2x128xf32>, vector<128x512xf32>, vector<2x512xf32> -> vector<2x512xf32>
    %62 = vector.broadcast %4 : vector<1x512xf32> to vector<2x512xf32>
    %63 = arith.addf %62, %61 : vector<2x512xf32>
    %64 = vector.extract_strided_slice %63 {offsets = [0, 0], sizes = [2, 128], strides = [1, 1]} : vector<2x512xf32> to vector<2x128xf32>
    %cst_29 = arith.constant 5.000000e-01 : f32
    %65 = vector.broadcast %cst_29 : f32 to vector<2x128xf32>
    %66 = arith.mulf %65, %64 : vector<2x128xf32>
    %67 = math.tanh %66 : vector<2x128xf32>
    %cst_30 = arith.constant 5.000000e-01 : f32
    %68 = vector.broadcast %cst_30 : f32 to vector<2x128xf32>
    %69 = arith.mulf %68, %67 : vector<2x128xf32>
    %cst_31 = arith.constant 5.000000e-01 : f32
    %70 = vector.broadcast %cst_31 : f32 to vector<2x128xf32>
    %71 = arith.addf %69, %70 : vector<2x128xf32>
    %72 = vector.extract_strided_slice %63 {offsets = [0, 128], sizes = [2, 128], strides = [1, 1]} : vector<2x512xf32> to vector<2x128xf32>
    %cst_32 = arith.constant 5.000000e-01 : f32
    %73 = vector.broadcast %cst_32 : f32 to vector<2x128xf32>
    %74 = arith.mulf %73, %72 : vector<2x128xf32>
    %75 = math.tanh %74 : vector<2x128xf32>
    %cst_33 = arith.constant 5.000000e-01 : f32
    %76 = vector.broadcast %cst_33 : f32 to vector<2x128xf32>
    %77 = arith.mulf %76, %75 : vector<2x128xf32>
    %cst_34 = arith.constant 5.000000e-01 : f32
    %78 = vector.broadcast %cst_34 : f32 to vector<2x128xf32>
    %79 = arith.addf %77, %78 : vector<2x128xf32>
    %80 = vector.extract_strided_slice %63 {offsets = [0, 256], sizes = [2, 128], strides = [1, 1]} : vector<2x512xf32> to vector<2x128xf32>
    %81 = math.tanh %80 : vector<2x128xf32>
    %82 = vector.extract_strided_slice %63 {offsets = [0, 384], sizes = [2, 128], strides = [1, 1]} : vector<2x512xf32> to vector<2x128xf32>
    %cst_35 = arith.constant 5.000000e-01 : f32
    %83 = vector.broadcast %cst_35 : f32 to vector<2x128xf32>
    %84 = arith.mulf %83, %82 : vector<2x128xf32>
    %85 = math.tanh %84 : vector<2x128xf32>
    %cst_36 = arith.constant 5.000000e-01 : f32
    %86 = vector.broadcast %cst_36 : f32 to vector<2x128xf32>
    %87 = arith.mulf %86, %85 : vector<2x128xf32>
    %cst_37 = arith.constant 5.000000e-01 : f32
    %88 = vector.broadcast %cst_37 : f32 to vector<2x128xf32>
    %89 = arith.addf %87, %88 : vector<2x128xf32>
    %90 = arith.mulf %79, %52 : vector<2x128xf32>
    %91 = arith.mulf %71, %81 : vector<2x128xf32>
    %92 = arith.addf %90, %91 : vector<2x128xf32>
    %93 = math.tanh %92 : vector<2x128xf32>
    %94 = arith.mulf %89, %93 : vector<2x128xf32>
    %cst_38 = arith.constant dense<0.000000e+00> : vector<2x2xf32>
    %95 = tpu.matmul %94, %6, %cst_38 {dimension_numbers = #tpu.dot_dimension_numbers<[1], [0], [0], [1], [0, 0, 1, 1], [], []>} : vector<2x128xf32>, vector<128x2xf32>, vector<2x2xf32> -> vector<2x2xf32>
    %96 = vector.broadcast %5 : vector<1x2xf32> to vector<2x2xf32>
    %97 = arith.addf %95, %96 : vector<2x2xf32>
    %c1_39 = arith.constant 1 : index
    %c0_40 = arith.constant 0 : index
    %c0_41 = arith.constant 0 : index
    %98 = vector.load %arg3[%c1_39, %c0_40, %c0_41] : memref<8x2x2xf32, #tpu.memory_space<vmem>>, vector<1x2x2xf32>
    %99 = vector.shape_cast %98 : vector<1x2x2xf32> to vector<2x2xf32>
    %100 = vector.shape_cast %97 : vector<2x2xf32> to vector<1x2x2xf32>
    tpu.vector_store %arg3[%c1_39, %c0_40, %c0_41], %100 {strides = array<i32>} : memref<8x2x2xf32, #tpu.memory_space<vmem>>, vector<1x2x2xf32>,
    %cst_42 = arith.constant dense<0.000000e+00> : vector<2x512xf32>
    %101 = tpu.matmul %94, %3, %cst_42 {dimension_numbers = #tpu.dot_dimension_numbers<[1], [0], [0], [1], [0, 0, 1, 1], [], []>} : vector<2x128xf32>, vector<128x512xf32>, vector<2x512xf32> -> vector<2x512xf32>
    %102 = vector.broadcast %4 : vector<1x512xf32> to vector<2x512xf32>
    %103 = arith.addf %102, %101 : vector<2x512xf32>
    %104 = vector.extract_strided_slice %103 {offsets = [0, 0], sizes = [2, 128], strides = [1, 1]} : vector<2x512xf32> to vector<2x128xf32>
    %cst_43 = arith.constant 5.000000e-01 : f32
    %105 = vector.broadcast %cst_43 : f32 to vector<2x128xf32>
    %106 = arith.mulf %105, %104 : vector<2x128xf32>
    %107 = math.tanh %106 : vector<2x128xf32>
    %cst_44 = arith.constant 5.000000e-01 : f32
    %108 = vector.broadcast %cst_44 : f32 to vector<2x128xf32>
    %109 = arith.mulf %108, %107 : vector<2x128xf32>
    %cst_45 = arith.constant 5.000000e-01 : f32
    %110 = vector.broadcast %cst_45 : f32 to vector<2x128xf32>
    %111 = arith.addf %109, %110 : vector<2x128xf32>
    %112 = vector.extract_strided_slice %103 {offsets = [0, 128], sizes = [2, 128], strides = [1, 1]} : vector<2x512xf32> to vector<2x128xf32>
    %cst_46 = arith.constant 5.000000e-01 : f32
    %113 = vector.broadcast %cst_46 : f32 to vector<2x128xf32>
    %114 = arith.mulf %113, %112 : vector<2x128xf32>
    %115 = math.tanh %114 : vector<2x128xf32>
    %cst_47 = arith.constant 5.000000e-01 : f32
    %116 = vector.broadcast %cst_47 : f32 to vector<2x128xf32>
    %117 = arith.mulf %116, %115 : vector<2x128xf32>
    %cst_48 = arith.constant 5.000000e-01 : f32
    %118 = vector.broadcast %cst_48 : f32 to vector<2x128xf32>
    %119 = arith.addf %117, %118 : vector<2x128xf32>
    %120 = vector.extract_strided_slice %103 {offsets = [0, 256], sizes = [2, 128], strides = [1, 1]} : vector<2x512xf32> to vector<2x128xf32>
    %121 = math.tanh %120 : vector<2x128xf32>
    %122 = vector.extract_strided_slice %103 {offsets = [0, 384], sizes = [2, 128], strides = [1, 1]} : vector<2x512xf32> to vector<2x128xf32>
    %cst_49 = arith.constant 5.000000e-01 : f32
    %123 = vector.broadcast %cst_49 : f32 to vector<2x128xf32>
    %124 = arith.mulf %123, %122 : vector<2x128xf32>
    %125 = math.tanh %124 : vector<2x128xf32>
    %cst_50 = arith.constant 5.000000e-01 : f32
    %126 = vector.broadcast %cst_50 : f32 to vector<2x128xf32>
    %127 = arith.mulf %126, %125 : vector<2x128xf32>
    %cst_51 = arith.constant 5.000000e-01 : f32
    %128 = vector.broadcast %cst_51 : f32 to vector<2x128xf32>
    %129 = arith.addf %127, %128 : vector<2x128xf32>
    %130 = arith.mulf %119, %92 : vector<2x128xf32>
    %131 = arith.mulf %111, %121 : vector<2x128xf32>
    %132 = arith.addf %130, %131 : vector<2x128xf32>
    %133 = math.tanh %132 : vector<2x128xf32>
    %134 = arith.mulf %129, %133 : vector<2x128xf32>
    %cst_52 = arith.constant dense<0.000000e+00> : vector<2x2xf32>
    %135 = tpu.matmul %134, %6, %cst_52 {dimension_numbers = #tpu.dot_dimension_numbers<[1], [0], [0], [1], [0, 0, 1, 1], [], []>} : vector<2x128xf32>, vector<128x2xf32>, vector<2x2xf32> -> vector<2x2xf32>
    %136 = vector.broadcast %5 : vector<1x2xf32> to vector<2x2xf32>
    %137 = arith.addf %135, %136 : vector<2x2xf32>
    %c2_53 = arith.constant 2 : index
    %c0_54 = arith.constant 0 : index
    %c0_55 = arith.constant 0 : index
    %138 = vector.load %arg3[%c2_53, %c0_54, %c0_55] : memref<8x2x2xf32, #tpu.memory_space<vmem>>, vector<1x2x2xf32>
    %139 = vector.shape_cast %138 : vector<1x2x2xf32> to vector<2x2xf32>
    %140 = vector.shape_cast %137 : vector<2x2xf32> to vector<1x2x2xf32>
    tpu.vector_store %arg3[%c2_53, %c0_54, %c0_55], %140 {strides = array<i32>} : memref<8x2x2xf32, #tpu.memory_space<vmem>>, vector<1x2x2xf32>,
    %c3_56 = arith.constant 3 : index
    %c0_57 = arith.constant 0 : index
    %c0_58 = arith.constant 0 : index
    %141 = vector.load %arg0[%c3_56, %c0_57, %c0_58] : memref<8x2x2xf32, #tpu.memory_space<vmem>>, vector<1x2x2xf32>
    %142 = vector.shape_cast %141 : vector<1x2x2xf32> to vector<2x2xf32>
    %c2_59 = arith.constant 2 : index
    %c0_60 = arith.constant 0 : index
    %143 = vector.load %arg2[%c2_59, %c0_60] : memref<136x512xf32, #tpu.memory_space<vmem>>, vector<1x512xf32>
    %144 = vector.extract_strided_slice %142 {offsets = [0, 0], sizes = [2, 1], strides = [1, 1]} : vector<2x2xf32> to vector<2x1xf32>
    %c0_61 = arith.constant 0 : index
    %c0_62 = arith.constant 0 : index
    %145 = vector.load %arg2[%c0_61, %c0_62] : memref<136x512xf32, #tpu.memory_space<vmem>>, vector<1x512xf32>
    %146 = vector.broadcast %144 : vector<2x1xf32> to vector<2x512xf32>
    %147 = vector.broadcast %145 : vector<1x512xf32> to vector<2x512xf32>
    %148 = arith.mulf %146, %147 : vector<2x512xf32>
    %149 = vector.broadcast %143 : vector<1x512xf32> to vector<2x512xf32>
    %150 = arith.addf %149, %148 : vector<2x512xf32>
    %151 = vector.extract_strided_slice %142 {offsets = [0, 1], sizes = [2, 1], strides = [1, 1]} : vector<2x2xf32> to vector<2x1xf32>
    %c1_63 = arith.constant 1 : index
    %c0_64 = arith.constant 0 : index
    %152 = vector.load %arg2[%c1_63, %c0_64] : memref<136x512xf32, #tpu.memory_space<vmem>>, vector<1x512xf32>
    %153 = vector.broadcast %151 : vector<2x1xf32> to vector<2x512xf32>
    %154 = vector.broadcast %152 : vector<1x512xf32> to vector<2x512xf32>
    %155 = arith.mulf %153, %154 : vector<2x512xf32>
    %156 = arith.addf %150, %155 : vector<2x512xf32>
    %cst_65 = arith.constant dense<0.000000e+00> : vector<2x512xf32>
    %157 = tpu.matmul %134, %1, %cst_65 {dimension_numbers = #tpu.dot_dimension_numbers<[1], [0], [0], [1], [0, 0, 1, 1], [], []>} : vector<2x128xf32>, vector<128x512xf32>, vector<2x512xf32> -> vector<2x512xf32>
    %158 = arith.addf %156, %157 : vector<2x512xf32>
    %159 = vector.extract_strided_slice %158 {offsets = [0, 0], sizes = [2, 128], strides = [1, 1]} : vector<2x512xf32> to vector<2x128xf32>
    %cst_66 = arith.constant 5.000000e-01 : f32
    %160 = vector.broadcast %cst_66 : f32 to vector<2x128xf32>
    %161 = arith.mulf %160, %159 : vector<2x128xf32>
    %162 = math.tanh %161 : vector<2x128xf32>
    %cst_67 = arith.constant 5.000000e-01 : f32
    %163 = vector.broadcast %cst_67 : f32 to vector<2x128xf32>
    %164 = arith.mulf %163, %162 : vector<2x128xf32>
    %cst_68 = arith.constant 5.000000e-01 : f32
    %165 = vector.broadcast %cst_68 : f32 to vector<2x128xf32>
    %166 = arith.addf %164, %165 : vector<2x128xf32>
    %167 = vector.extract_strided_slice %158 {offsets = [0, 128], sizes = [2, 128], strides = [1, 1]} : vector<2x512xf32> to vector<2x128xf32>
    %cst_69 = arith.constant 5.000000e-01 : f32
    %168 = vector.broadcast %cst_69 : f32 to vector<2x128xf32>
    %169 = arith.mulf %168, %167 : vector<2x128xf32>
    %170 = math.tanh %169 : vector<2x128xf32>
    %cst_70 = arith.constant 5.000000e-01 : f32
    %171 = vector.broadcast %cst_70 : f32 to vector<2x128xf32>
    %172 = arith.mulf %171, %170 : vector<2x128xf32>
    %cst_71 = arith.constant 5.000000e-01 : f32
    %173 = vector.broadcast %cst_71 : f32 to vector<2x128xf32>
    %174 = arith.addf %172, %173 : vector<2x128xf32>
    %175 = vector.extract_strided_slice %158 {offsets = [0, 256], sizes = [2, 128], strides = [1, 1]} : vector<2x512xf32> to vector<2x128xf32>
    %176 = math.tanh %175 : vector<2x128xf32>
    %177 = vector.extract_strided_slice %158 {offsets = [0, 384], sizes = [2, 128], strides = [1, 1]} : vector<2x512xf32> to vector<2x128xf32>
    %cst_72 = arith.constant 5.000000e-01 : f32
    %178 = vector.broadcast %cst_72 : f32 to vector<2x128xf32>
    %179 = arith.mulf %178, %177 : vector<2x128xf32>
    %180 = math.tanh %179 : vector<2x128xf32>
    %cst_73 = arith.constant 5.000000e-01 : f32
    %181 = vector.broadcast %cst_73 : f32 to vector<2x128xf32>
    %182 = arith.mulf %181, %180 : vector<2x128xf32>
    %cst_74 = arith.constant 5.000000e-01 : f32
    %183 = vector.broadcast %cst_74 : f32 to vector<2x128xf32>
    %184 = arith.addf %182, %183 : vector<2x128xf32>
    %185 = arith.mulf %174, %132 : vector<2x128xf32>
    %186 = arith.mulf %166, %176 : vector<2x128xf32>
    %187 = arith.addf %185, %186 : vector<2x128xf32>
    %188 = math.tanh %187 : vector<2x128xf32>
    %189 = arith.mulf %184, %188 : vector<2x128xf32>
    %cst_75 = arith.constant dense<0.000000e+00> : vector<2x2xf32>
    %190 = tpu.matmul %189, %6, %cst_75 {dimension_numbers = #tpu.dot_dimension_numbers<[1], [0], [0], [1], [0, 0, 1, 1], [], []>} : vector<2x128xf32>, vector<128x2xf32>, vector<2x2xf32> -> vector<2x2xf32>
    %191 = vector.broadcast %5 : vector<1x2xf32> to vector<2x2xf32>
    %192 = arith.addf %190, %191 : vector<2x2xf32>
    %c3_76 = arith.constant 3 : index
    %c0_77 = arith.constant 0 : index
    %c0_78 = arith.constant 0 : index
    %193 = vector.load %arg3[%c3_76, %c0_77, %c0_78] : memref<8x2x2xf32, #tpu.memory_space<vmem>>, vector<1x2x2xf32>
    %194 = vector.shape_cast %193 : vector<1x2x2xf32> to vector<2x2xf32>
    %195 = vector.shape_cast %192 : vector<2x2xf32> to vector<1x2x2xf32>
    tpu.vector_store %arg3[%c3_76, %c0_77, %c0_78], %195 {strides = array<i32>} : memref<8x2x2xf32, #tpu.memory_space<vmem>>, vector<1x2x2xf32>,
    %cst_79 = arith.constant dense<0.000000e+00> : vector<2x512xf32>
    %196 = tpu.matmul %189, %3, %cst_79 {dimension_numbers = #tpu.dot_dimension_numbers<[1], [0], [0], [1], [0, 0, 1, 1], [], []>} : vector<2x128xf32>, vector<128x512xf32>, vector<2x512xf32> -> vector<2x512xf32>
    %197 = vector.broadcast %4 : vector<1x512xf32> to vector<2x512xf32>
    %198 = arith.addf %197, %196 : vector<2x512xf32>
    %199 = vector.extract_strided_slice %198 {offsets = [0, 0], sizes = [2, 128], strides = [1, 1]} : vector<2x512xf32> to vector<2x128xf32>
    %cst_80 = arith.constant 5.000000e-01 : f32
    %200 = vector.broadcast %cst_80 : f32 to vector<2x128xf32>
    %201 = arith.mulf %200, %199 : vector<2x128xf32>
    %202 = math.tanh %201 : vector<2x128xf32>
    %cst_81 = arith.constant 5.000000e-01 : f32
    %203 = vector.broadcast %cst_81 : f32 to vector<2x128xf32>
    %204 = arith.mulf %203, %202 : vector<2x128xf32>
    %cst_82 = arith.constant 5.000000e-01 : f32
    %205 = vector.broadcast %cst_82 : f32 to vector<2x128xf32>
    %206 = arith.addf %204, %205 : vector<2x128xf32>
    %207 = vector.extract_strided_slice %198 {offsets = [0, 128], sizes = [2, 128], strides = [1, 1]} : vector<2x512xf32> to vector<2x128xf32>
    %cst_83 = arith.constant 5.000000e-01 : f32
    %208 = vector.broadcast %cst_83 : f32 to vector<2x128xf32>
    %209 = arith.mulf %208, %207 : vector<2x128xf32>
    %210 = math.tanh %209 : vector<2x128xf32>
    %cst_84 = arith.constant 5.000000e-01 : f32
    %211 = vector.broadcast %cst_84 : f32 to vector<2x128xf32>
    %212 = arith.mulf %211, %210 : vector<2x128xf32>
    %cst_85 = arith.constant 5.000000e-01 : f32
    %213 = vector.broadcast %cst_85 : f32 to vector<2x128xf32>
    %214 = arith.addf %212, %213 : vector<2x128xf32>
    %215 = vector.extract_strided_slice %198 {offsets = [0, 256], sizes = [2, 128], strides = [1, 1]} : vector<2x512xf32> to vector<2x128xf32>
    %216 = math.tanh %215 : vector<2x128xf32>
    %217 = vector.extract_strided_slice %198 {offsets = [0, 384], sizes = [2, 128], strides = [1, 1]} : vector<2x512xf32> to vector<2x128xf32>
    %cst_86 = arith.constant 5.000000e-01 : f32
    %218 = vector.broadcast %cst_86 : f32 to vector<2x128xf32>
    %219 = arith.mulf %218, %217 : vector<2x128xf32>
    %220 = math.tanh %219 : vector<2x128xf32>
    %cst_87 = arith.constant 5.000000e-01 : f32
    %221 = vector.broadcast %cst_87 : f32 to vector<2x128xf32>
    %222 = arith.mulf %221, %220 : vector<2x128xf32>
    %cst_88 = arith.constant 5.000000e-01 : f32
    %223 = vector.broadcast %cst_88 : f32 to vector<2x128xf32>
    %224 = arith.addf %222, %223 : vector<2x128xf32>
    %225 = arith.mulf %214, %187 : vector<2x128xf32>
    %226 = arith.mulf %206, %216 : vector<2x128xf32>
    %227 = arith.addf %225, %226 : vector<2x128xf32>
    %228 = math.tanh %227 : vector<2x128xf32>
    %229 = arith.mulf %224, %228 : vector<2x128xf32>
    %cst_89 = arith.constant dense<0.000000e+00> : vector<2x2xf32>
    %230 = tpu.matmul %229, %6, %cst_89 {dimension_numbers = #tpu.dot_dimension_numbers<[1], [0], [0], [1], [0, 0, 1, 1], [], []>} : vector<2x128xf32>, vector<128x2xf32>, vector<2x2xf32> -> vector<2x2xf32>
    %231 = vector.broadcast %5 : vector<1x2xf32> to vector<2x2xf32>
    %232 = arith.addf %230, %231 : vector<2x2xf32>
    %c4_90 = arith.constant 4 : index
    %c0_91 = arith.constant 0 : index
    %c0_92 = arith.constant 0 : index
    %233 = vector.load %arg3[%c4_90, %c0_91, %c0_92] : memref<8x2x2xf32, #tpu.memory_space<vmem>>, vector<1x2x2xf32>
    %234 = vector.shape_cast %233 : vector<1x2x2xf32> to vector<2x2xf32>
    %235 = vector.shape_cast %232 : vector<2x2xf32> to vector<1x2x2xf32>
    tpu.vector_store %arg3[%c4_90, %c0_91, %c0_92], %235 {strides = array<i32>} : memref<8x2x2xf32, #tpu.memory_space<vmem>>, vector<1x2x2xf32>,
    %cst_93 = arith.constant dense<0.000000e+00> : vector<2x512xf32>
    %236 = tpu.matmul %229, %3, %cst_93 {dimension_numbers = #tpu.dot_dimension_numbers<[1], [0], [0], [1], [0, 0, 1, 1], [], []>} : vector<2x128xf32>, vector<128x512xf32>, vector<2x512xf32> -> vector<2x512xf32>
    %237 = vector.broadcast %4 : vector<1x512xf32> to vector<2x512xf32>
    %238 = arith.addf %237, %236 : vector<2x512xf32>
    %239 = vector.extract_strided_slice %238 {offsets = [0, 0], sizes = [2, 128], strides = [1, 1]} : vector<2x512xf32> to vector<2x128xf32>
    %cst_94 = arith.constant 5.000000e-01 : f32
    %240 = vector.broadcast %cst_94 : f32 to vector<2x128xf32>
    %241 = arith.mulf %240, %239 : vector<2x128xf32>
    %242 = math.tanh %241 : vector<2x128xf32>
    %cst_95 = arith.constant 5.000000e-01 : f32
    %243 = vector.broadcast %cst_95 : f32 to vector<2x128xf32>
    %244 = arith.mulf %243, %242 : vector<2x128xf32>
    %cst_96 = arith.constant 5.000000e-01 : f32
    %245 = vector.broadcast %cst_96 : f32 to vector<2x128xf32>
    %246 = arith.addf %244, %245 : vector<2x128xf32>
    %247 = vector.extract_strided_slice %238 {offsets = [0, 128], sizes = [2, 128], strides = [1, 1]} : vector<2x512xf32> to vector<2x128xf32>
    %cst_97 = arith.constant 5.000000e-01 : f32
    %248 = vector.broadcast %cst_97 : f32 to vector<2x128xf32>
    %249 = arith.mulf %248, %247 : vector<2x128xf32>
    %250 = math.tanh %249 : vector<2x128xf32>
    %cst_98 = arith.constant 5.000000e-01 : f32
    %251 = vector.broadcast %cst_98 : f32 to vector<2x128xf32>
    %252 = arith.mulf %251, %250 : vector<2x128xf32>
    %cst_99 = arith.constant 5.000000e-01 : f32
    %253 = vector.broadcast %cst_99 : f32 to vector<2x128xf32>
    %254 = arith.addf %252, %253 : vector<2x128xf32>
    %255 = vector.extract_strided_slice %238 {offsets = [0, 256], sizes = [2, 128], strides = [1, 1]} : vector<2x512xf32> to vector<2x128xf32>
    %256 = math.tanh %255 : vector<2x128xf32>
    %257 = vector.extract_strided_slice %238 {offsets = [0, 384], sizes = [2, 128], strides = [1, 1]} : vector<2x512xf32> to vector<2x128xf32>
    %cst_100 = arith.constant 5.000000e-01 : f32
    %258 = vector.broadcast %cst_100 : f32 to vector<2x128xf32>
    %259 = arith.mulf %258, %257 : vector<2x128xf32>
    %260 = math.tanh %259 : vector<2x128xf32>
    %cst_101 = arith.constant 5.000000e-01 : f32
    %261 = vector.broadcast %cst_101 : f32 to vector<2x128xf32>
    %262 = arith.mulf %261, %260 : vector<2x128xf32>
    %cst_102 = arith.constant 5.000000e-01 : f32
    %263 = vector.broadcast %cst_102 : f32 to vector<2x128xf32>
    %264 = arith.addf %262, %263 : vector<2x128xf32>
    %265 = arith.mulf %254, %227 : vector<2x128xf32>
    %266 = arith.mulf %246, %256 : vector<2x128xf32>
    %267 = arith.addf %265, %266 : vector<2x128xf32>
    %268 = math.tanh %267 : vector<2x128xf32>
    %269 = arith.mulf %264, %268 : vector<2x128xf32>
    %cst_103 = arith.constant dense<0.000000e+00> : vector<2x2xf32>
    %270 = tpu.matmul %269, %6, %cst_103 {dimension_numbers = #tpu.dot_dimension_numbers<[1], [0], [0], [1], [0, 0, 1, 1], [], []>} : vector<2x128xf32>, vector<128x2xf32>, vector<2x2xf32> -> vector<2x2xf32>
    %271 = vector.broadcast %5 : vector<1x2xf32> to vector<2x2xf32>
    %272 = arith.addf %270, %271 : vector<2x2xf32>
    %c5 = arith.constant 5 : index
    %c0_104 = arith.constant 0 : index
    %c0_105 = arith.constant 0 : index
    %273 = vector.load %arg3[%c5, %c0_104, %c0_105] : memref<8x2x2xf32, #tpu.memory_space<vmem>>, vector<1x2x2xf32>
    %274 = vector.shape_cast %273 : vector<1x2x2xf32> to vector<2x2xf32>
    %275 = vector.shape_cast %272 : vector<2x2xf32> to vector<1x2x2xf32>
    tpu.vector_store %arg3[%c5, %c0_104, %c0_105], %275 {strides = array<i32>} : memref<8x2x2xf32, #tpu.memory_space<vmem>>, vector<1x2x2xf32>,
    %c6 = arith.constant 6 : index
    %c0_106 = arith.constant 0 : index
    %c0_107 = arith.constant 0 : index
    %276 = vector.load %arg0[%c6, %c0_106, %c0_107] : memref<8x2x2xf32, #tpu.memory_space<vmem>>, vector<1x2x2xf32>
    %277 = vector.shape_cast %276 : vector<1x2x2xf32> to vector<2x2xf32>
    %c2_108 = arith.constant 2 : index
    %c0_109 = arith.constant 0 : index
    %278 = vector.load %arg2[%c2_108, %c0_109] : memref<136x512xf32, #tpu.memory_space<vmem>>, vector<1x512xf32>
    %279 = vector.extract_strided_slice %277 {offsets = [0, 0], sizes = [2, 1], strides = [1, 1]} : vector<2x2xf32> to vector<2x1xf32>
    %c0_110 = arith.constant 0 : index
    %c0_111 = arith.constant 0 : index
    %280 = vector.load %arg2[%c0_110, %c0_111] : memref<136x512xf32, #tpu.memory_space<vmem>>, vector<1x512xf32>
    %281 = vector.broadcast %279 : vector<2x1xf32> to vector<2x512xf32>
    %282 = vector.broadcast %280 : vector<1x512xf32> to vector<2x512xf32>
    %283 = arith.mulf %281, %282 : vector<2x512xf32>
    %284 = vector.broadcast %278 : vector<1x512xf32> to vector<2x512xf32>
    %285 = arith.addf %284, %283 : vector<2x512xf32>
    %286 = vector.extract_strided_slice %277 {offsets = [0, 1], sizes = [2, 1], strides = [1, 1]} : vector<2x2xf32> to vector<2x1xf32>
    %c1_112 = arith.constant 1 : index
    %c0_113 = arith.constant 0 : index
    %287 = vector.load %arg2[%c1_112, %c0_113] : memref<136x512xf32, #tpu.memory_space<vmem>>, vector<1x512xf32>
    %288 = vector.broadcast %286 : vector<2x1xf32> to vector<2x512xf32>
    %289 = vector.broadcast %287 : vector<1x512xf32> to vector<2x512xf32>
    %290 = arith.mulf %288, %289 : vector<2x512xf32>
    %291 = arith.addf %285, %290 : vector<2x512xf32>
    %cst_114 = arith.constant dense<0.000000e+00> : vector<2x512xf32>
    %292 = tpu.matmul %269, %1, %cst_114 {dimension_numbers = #tpu.dot_dimension_numbers<[1], [0], [0], [1], [0, 0, 1, 1], [], []>} : vector<2x128xf32>, vector<128x512xf32>, vector<2x512xf32> -> vector<2x512xf32>
    %293 = arith.addf %291, %292 : vector<2x512xf32>
    %294 = vector.extract_strided_slice %293 {offsets = [0, 0], sizes = [2, 128], strides = [1, 1]} : vector<2x512xf32> to vector<2x128xf32>
    %cst_115 = arith.constant 5.000000e-01 : f32
    %295 = vector.broadcast %cst_115 : f32 to vector<2x128xf32>
    %296 = arith.mulf %295, %294 : vector<2x128xf32>
    %297 = math.tanh %296 : vector<2x128xf32>
    %cst_116 = arith.constant 5.000000e-01 : f32
    %298 = vector.broadcast %cst_116 : f32 to vector<2x128xf32>
    %299 = arith.mulf %298, %297 : vector<2x128xf32>
    %cst_117 = arith.constant 5.000000e-01 : f32
    %300 = vector.broadcast %cst_117 : f32 to vector<2x128xf32>
    %301 = arith.addf %299, %300 : vector<2x128xf32>
    %302 = vector.extract_strided_slice %293 {offsets = [0, 128], sizes = [2, 128], strides = [1, 1]} : vector<2x512xf32> to vector<2x128xf32>
    %cst_118 = arith.constant 5.000000e-01 : f32
    %303 = vector.broadcast %cst_118 : f32 to vector<2x128xf32>
    %304 = arith.mulf %303, %302 : vector<2x128xf32>
    %305 = math.tanh %304 : vector<2x128xf32>
    %cst_119 = arith.constant 5.000000e-01 : f32
    %306 = vector.broadcast %cst_119 : f32 to vector<2x128xf32>
    %307 = arith.mulf %306, %305 : vector<2x128xf32>
    %cst_120 = arith.constant 5.000000e-01 : f32
    %308 = vector.broadcast %cst_120 : f32 to vector<2x128xf32>
    %309 = arith.addf %307, %308 : vector<2x128xf32>
    %310 = vector.extract_strided_slice %293 {offsets = [0, 256], sizes = [2, 128], strides = [1, 1]} : vector<2x512xf32> to vector<2x128xf32>
    %311 = math.tanh %310 : vector<2x128xf32>
    %312 = vector.extract_strided_slice %293 {offsets = [0, 384], sizes = [2, 128], strides = [1, 1]} : vector<2x512xf32> to vector<2x128xf32>
    %cst_121 = arith.constant 5.000000e-01 : f32
    %313 = vector.broadcast %cst_121 : f32 to vector<2x128xf32>
    %314 = arith.mulf %313, %312 : vector<2x128xf32>
    %315 = math.tanh %314 : vector<2x128xf32>
    %cst_122 = arith.constant 5.000000e-01 : f32
    %316 = vector.broadcast %cst_122 : f32 to vector<2x128xf32>
    %317 = arith.mulf %316, %315 : vector<2x128xf32>
    %cst_123 = arith.constant 5.000000e-01 : f32
    %318 = vector.broadcast %cst_123 : f32 to vector<2x128xf32>
    %319 = arith.addf %317, %318 : vector<2x128xf32>
    %320 = arith.mulf %309, %267 : vector<2x128xf32>
    %321 = arith.mulf %301, %311 : vector<2x128xf32>
    %322 = arith.addf %320, %321 : vector<2x128xf32>
    %323 = math.tanh %322 : vector<2x128xf32>
    %324 = arith.mulf %319, %323 : vector<2x128xf32>
    %cst_124 = arith.constant dense<0.000000e+00> : vector<2x2xf32>
    %325 = tpu.matmul %324, %6, %cst_124 {dimension_numbers = #tpu.dot_dimension_numbers<[1], [0], [0], [1], [0, 0, 1, 1], [], []>} : vector<2x128xf32>, vector<128x2xf32>, vector<2x2xf32> -> vector<2x2xf32>
    %326 = vector.broadcast %5 : vector<1x2xf32> to vector<2x2xf32>
    %327 = arith.addf %325, %326 : vector<2x2xf32>
    %c6_125 = arith.constant 6 : index
    %c0_126 = arith.constant 0 : index
    %c0_127 = arith.constant 0 : index
    %328 = vector.load %arg3[%c6_125, %c0_126, %c0_127] : memref<8x2x2xf32, #tpu.memory_space<vmem>>, vector<1x2x2xf32>
    %329 = vector.shape_cast %328 : vector<1x2x2xf32> to vector<2x2xf32>
    %330 = vector.shape_cast %327 : vector<2x2xf32> to vector<1x2x2xf32>
    tpu.vector_store %arg3[%c6_125, %c0_126, %c0_127], %330 {strides = array<i32>} : memref<8x2x2xf32, #tpu.memory_space<vmem>>, vector<1x2x2xf32>,
    %cst_128 = arith.constant dense<0.000000e+00> : vector<2x512xf32>
    %331 = tpu.matmul %324, %3, %cst_128 {dimension_numbers = #tpu.dot_dimension_numbers<[1], [0], [0], [1], [0, 0, 1, 1], [], []>} : vector<2x128xf32>, vector<128x512xf32>, vector<2x512xf32> -> vector<2x512xf32>
    %332 = vector.broadcast %4 : vector<1x512xf32> to vector<2x512xf32>
    %333 = arith.addf %332, %331 : vector<2x512xf32>
    %334 = vector.extract_strided_slice %333 {offsets = [0, 0], sizes = [2, 128], strides = [1, 1]} : vector<2x512xf32> to vector<2x128xf32>
    %cst_129 = arith.constant 5.000000e-01 : f32
    %335 = vector.broadcast %cst_129 : f32 to vector<2x128xf32>
    %336 = arith.mulf %335, %334 : vector<2x128xf32>
    %337 = math.tanh %336 : vector<2x128xf32>
    %cst_130 = arith.constant 5.000000e-01 : f32
    %338 = vector.broadcast %cst_130 : f32 to vector<2x128xf32>
    %339 = arith.mulf %338, %337 : vector<2x128xf32>
    %cst_131 = arith.constant 5.000000e-01 : f32
    %340 = vector.broadcast %cst_131 : f32 to vector<2x128xf32>
    %341 = arith.addf %339, %340 : vector<2x128xf32>
    %342 = vector.extract_strided_slice %333 {offsets = [0, 128], sizes = [2, 128], strides = [1, 1]} : vector<2x512xf32> to vector<2x128xf32>
    %cst_132 = arith.constant 5.000000e-01 : f32
    %343 = vector.broadcast %cst_132 : f32 to vector<2x128xf32>
    %344 = arith.mulf %343, %342 : vector<2x128xf32>
    %345 = math.tanh %344 : vector<2x128xf32>
    %cst_133 = arith.constant 5.000000e-01 : f32
    %346 = vector.broadcast %cst_133 : f32 to vector<2x128xf32>
    %347 = arith.mulf %346, %345 : vector<2x128xf32>
    %cst_134 = arith.constant 5.000000e-01 : f32
    %348 = vector.broadcast %cst_134 : f32 to vector<2x128xf32>
    %349 = arith.addf %347, %348 : vector<2x128xf32>
    %350 = vector.extract_strided_slice %333 {offsets = [0, 256], sizes = [2, 128], strides = [1, 1]} : vector<2x512xf32> to vector<2x128xf32>
    %351 = math.tanh %350 : vector<2x128xf32>
    %352 = vector.extract_strided_slice %333 {offsets = [0, 384], sizes = [2, 128], strides = [1, 1]} : vector<2x512xf32> to vector<2x128xf32>
    %cst_135 = arith.constant 5.000000e-01 : f32
    %353 = vector.broadcast %cst_135 : f32 to vector<2x128xf32>
    %354 = arith.mulf %353, %352 : vector<2x128xf32>
    %355 = math.tanh %354 : vector<2x128xf32>
    %cst_136 = arith.constant 5.000000e-01 : f32
    %356 = vector.broadcast %cst_136 : f32 to vector<2x128xf32>
    %357 = arith.mulf %356, %355 : vector<2x128xf32>
    %cst_137 = arith.constant 5.000000e-01 : f32
    %358 = vector.broadcast %cst_137 : f32 to vector<2x128xf32>
    %359 = arith.addf %357, %358 : vector<2x128xf32>
    %360 = arith.mulf %349, %322 : vector<2x128xf32>
    %361 = arith.mulf %341, %351 : vector<2x128xf32>
    %362 = arith.addf %360, %361 : vector<2x128xf32>
    %363 = math.tanh %362 : vector<2x128xf32>
    %364 = arith.mulf %359, %363 : vector<2x128xf32>
    %cst_138 = arith.constant dense<0.000000e+00> : vector<2x2xf32>
    %365 = tpu.matmul %364, %6, %cst_138 {dimension_numbers = #tpu.dot_dimension_numbers<[1], [0], [0], [1], [0, 0, 1, 1], [], []>} : vector<2x128xf32>, vector<128x2xf32>, vector<2x2xf32> -> vector<2x2xf32>
    %366 = vector.broadcast %5 : vector<1x2xf32> to vector<2x2xf32>
    %367 = arith.addf %365, %366 : vector<2x2xf32>
    %c7 = arith.constant 7 : index
    %c0_139 = arith.constant 0 : index
    %c0_140 = arith.constant 0 : index
    %368 = vector.load %arg3[%c7, %c0_139, %c0_140] : memref<8x2x2xf32, #tpu.memory_space<vmem>>, vector<1x2x2xf32>
    %369 = vector.shape_cast %368 : vector<1x2x2xf32> to vector<2x2xf32>
    %370 = vector.shape_cast %367 : vector<2x2xf32> to vector<1x2x2xf32>
    tpu.vector_store %arg3[%c7, %c0_139, %c0_140], %370 {strides = array<i32>} : memref<8x2x2xf32, #tpu.memory_space<vmem>>, vector<1x2x2xf32>,
    return
  }
}

</mosaic_0001>

<llo_original>
// kernel: lstm_cell_model_forward.1
$region0: #{lstm_cell_model_forward.1}
  #allocation0 [shape = 'u32[]', space=smem, size = 0x4, offset = 0x4, fixed_abs, tag = 'smem constant byte address 0x4 - core index']
  #allocation1 [shape = 'u32[72,128]{1,0:T(1,128)}', space=vmem, size = 0x9000, scoped, tag = 'internal scratch']
  %s0 = inlined_call_operand.vmem [shape: f32[8,2,2], index: 0, kind: input, shape index: {}]
  %s1 = inlined_call_operand.vmem [shape: f32[2,128,512], index: 1, kind: input, shape index: {}]
  %s2 = inlined_call_operand.vmem [shape: f32[136,512], index: 2, kind: input, shape index: {}]
  %s3 = inlined_call_operand.vmem [shape: f32[8,2,2], index: 3, kind: output, shape index: {}]
  %s4 = sld [smem:[#allocation0]]
  $region22: #{lstm_cell_model_forward.1} parent=0
    _
  %s6 = ssub.s32 1, %s4
  %s7 = scalar_select 0, %s6, %s4
  // Predicated region
  $region2: #{lstm_cell_model_forward.1} parent=0 // pred_check
    _
  $region3: #{lstm_cell_model_forward.1} parent=0 // pred_check_branch
    %9 = sbr.rel (0) target = $region5
  $region4: #{lstm_cell_model_forward.1} parent=0 // pred_region
    _
  $region5: #{lstm_cell_model_forward.1} parent=0 // pred_fallthru
    _
  // Predicated region
  $region6: #{lstm_cell_model_forward.1} parent=0 // pred_check
    _
  $region7: #{lstm_cell_model_forward.1} parent=0 // pred_check_branch
    %11 = sbr.rel (0) target = $region9
  $region8: #{lstm_cell_model_forward.1} parent=0 // pred_region
    _
  $region9: #{lstm_cell_model_forward.1} parent=0 // pred_fallthru
    _
  // Predicated region
  $region10: #{lstm_cell_model_forward.1} parent=0 // pred_check
    _
  $region11: #{lstm_cell_model_forward.1} parent=0 // pred_check_branch
    %13 = sbr.rel (0) target = $region13
  $region12: #{lstm_cell_model_forward.1} parent=0 // pred_region
    _
  $region13: #{lstm_cell_model_forward.1} parent=0 // pred_fallthru
    _
  %v14 = vld [vmem:[%s1] sm:$0xff]
  %v15 = vld [vmem:[%s1 + $0x8] sm:$0xff]
  %v16 = vld [vmem:[%s1 + $0x10] sm:$0xff]
  %v17 = vld [vmem:[%s1 + $0x18] sm:$0xff]
  %v18 = vld [vmem:[%s1 + $0x20] sm:$0xff]
  %v19 = vld [vmem:[%s1 + $0x28] sm:$0xff]
  %v20 = vld [vmem:[%s1 + $0x30] sm:$0xff]
  %v21 = vld [vmem:[%s1 + $0x38] sm:$0xff]
  %v22 = vld [vmem:[%s1 + $0x40] sm:$0xff]
  %v23 = vld [vmem:[%s1 + $0x48] sm:$0xff]
  %v24 = vld [vmem:[%s1 + $0x50] sm:$0xff]
  %v25 = vld [vmem:[%s1 + $0x58] sm:$0xff]
  %v26 = vld [vmem:[%s1 + $0x60] sm:$0xff]
  %v27 = vld [vmem:[%s1 + $0x68] sm:$0xff]
  %v28 = vld [vmem:[%s1 + $0x70] sm:$0xff]
  %v29 = vld [vmem:[%s1 + $0x78] sm:$0xff]
  %v30 = vld [vmem:[%s1 + $0x80] sm:$0xff]
  %v31 = vld [vmem:[%s1 + $0x88] sm:$0xff]
  %v32 = vld [vmem:[%s1 + $0x90] sm:$0xff]
  %v33 = vld [vmem:[%s1 + $0x98] sm:$0xff]
  %v34 = vld [vmem:[%s1 + $0xa0] sm:$0xff]
  %v35 = vld [vmem:[%s1 + $0xa8] sm:$0xff]
  %v36 = vld [vmem:[%s1 + $0xb0] sm:$0xff]
  %v37 = vld [vmem:[%s1 + $0xb8] sm:$0xff]
  %v38 = vld [vmem:[%s1 + $0xc0] sm:$0xff]
  %v39 = vld [vmem:[%s1 + $0xc8] sm:$0xff]
  %v40 = vld [vmem:[%s1 + $0xd0] sm:$0xff]
  %v41 = vld [vmem:[%s1 + $0xd8] sm:$0xff]
  %v42 = vld [vmem:[%s1 + $0xe0] sm:$0xff]
  %v43 = vld [vmem:[%s1 + $0xe8] sm:$0xff]
  %v44 = vld [vmem:[%s1 + $0xf0] sm:$0xff]
  %v45 = vld [vmem:[%s1 + $0xf8] sm:$0xff]
  %v46 = vld [vmem:[%s1 + $0x100] sm:$0xff]
  %v47 = vld [vmem:[%s1 + $0x108] sm:$0xff]
  %v48 = vld [vmem:[%s1 + $0x110] sm:$0xff]
  %v49 = vld [vmem:[%s1 + $0x118] sm:$0xff]
  %v50 = vld [vmem:[%s1 + $0x120] sm:$0xff]
  %v51 = vld [vmem:[%s1 + $0x128] sm:$0xff]
  %v52 = vld [vmem:[%s1 + $0x130] sm:$0xff]
  %v53 = vld [vmem:[%s1 + $0x138] sm:$0xff]
  %v54 = vld [vmem:[%s1 + $0x140] sm:$0xff]
  %v55 = vld [vmem:[%s1 + $0x148] sm:$0xff]
  %v56 = vld [vmem:[%s1 + $0x150] sm:$0xff]
  %v57 = vld [vmem:[%s1 + $0x158] sm:$0xff]
  %v58 = vld [vmem:[%s1 + $0x160] sm:$0xff]
  %v59 = vld [vmem:[%s1 + $0x168] sm:$0xff]
  %v60 = vld [vmem:[%s1 + $0x170] sm:$0xff]
  %v61 = vld [vmem:[%s1 + $0x178] sm:$0xff]
  %v62 = vld [vmem:[%s1 + $0x180] sm:$0xff]
  %v63 = vld [vmem:[%s1 + $0x188] sm:$0xff]
  %v64 = vld [vmem:[%s1 + $0x190] sm:$0xff]
  %v65 = vld [vmem:[%s1 + $0x198] sm:$0xff]
  %v66 = vld [vmem:[%s1 + $0x1a0] sm:$0xff]
  %v67 = vld [vmem:[%s1 + $0x1a8] sm:$0xff]
  %v68 = vld [vmem:[%s1 + $0x1b0] sm:$0xff]
  %v69 = vld [vmem:[%s1 + $0x1b8] sm:$0xff]
  %v70 = vld [vmem:[%s1 + $0x1c0] sm:$0xff]
  %v71 = vld [vmem:[%s1 + $0x1c8] sm:$0xff]
  %v72 = vld [vmem:[%s1 + $0x1d0] sm:$0xff]
  %v73 = vld [vmem:[%s1 + $0x1d8] sm:$0xff]
  %v74 = vld [vmem:[%s1 + $0x1e0] sm:$0xff]
  %v75 = vld [vmem:[%s1 + $0x1e8] sm:$0xff]
  %v76 = vld [vmem:[%s1 + $0x1f0] sm:$0xff]
  %v77 = vld [vmem:[%s1 + $0x1f8] sm:$0xff]
  %s78 = scalar_lea.vmem %s1, 512
  %v79 = vld [vmem:[%s78] sm:$0xff]
  %v80 = vld [vmem:[%s78 + $0x8] sm:$0xff]
  %v81 = vld [vmem:[%s78 + $0x10] sm:$0xff]
  %v82 = vld [vmem:[%s78 + $0x18] sm:$0xff]
  %v83 = vld [vmem:[%s78 + $0x20] sm:$0xff]
  %v84 = vld [vmem:[%s78 + $0x28] sm:$0xff]
  %v85 = vld [vmem:[%s78 + $0x30] sm:$0xff]
  %v86 = vld [vmem:[%s78 + $0x38] sm:$0xff]
  %v87 = vld [vmem:[%s78 + $0x40] sm:$0xff]
  %v88 = vld [vmem:[%s78 + $0x48] sm:$0xff]
  %v89 = vld [vmem:[%s78 + $0x50] sm:$0xff]
  %v90 = vld [vmem:[%s78 + $0x58] sm:$0xff]
  %v91 = vld [vmem:[%s78 + $0x60] sm:$0xff]
  %v92 = vld [vmem:[%s78 + $0x68] sm:$0xff]
  %v93 = vld [vmem:[%s78 + $0x70] sm:$0xff]
  %v94 = vld [vmem:[%s78 + $0x78] sm:$0xff]
  %v95 = vld [vmem:[%s78 + $0x80] sm:$0xff]
  %v96 = vld [vmem:[%s78 + $0x88] sm:$0xff]
  %v97 = vld [vmem:[%s78 + $0x90] sm:$0xff]
  %v98 = vld [vmem:[%s78 + $0x98] sm:$0xff]
  %v99 = vld [vmem:[%s78 + $0xa0] sm:$0xff]
  %v100 = vld [vmem:[%s78 + $0xa8] sm:$0xff]
  %v101 = vld [vmem:[%s78 + $0xb0] sm:$0xff]
  %v102 = vld [vmem:[%s78 + $0xb8] sm:$0xff]
  %v103 = vld [vmem:[%s78 + $0xc0] sm:$0xff]
  %v104 = vld [vmem:[%s78 + $0xc8] sm:$0xff]
  %v105 = vld [vmem:[%s78 + $0xd0] sm:$0xff]
  %v106 = vld [vmem:[%s78 + $0xd8] sm:$0xff]
  %v107 = vld [vmem:[%s78 + $0xe0] sm:$0xff]
  %v108 = vld [vmem:[%s78 + $0xe8] sm:$0xff]
  %v109 = vld [vmem:[%s78 + $0xf0] sm:$0xff]
  %v110 = vld [vmem:[%s78 + $0xf8] sm:$0xff]
  %v111 = vld [vmem:[%s78 + $0x100] sm:$0xff]
  %v112 = vld [vmem:[%s78 + $0x108] sm:$0xff]
  %v113 = vld [vmem:[%s78 + $0x110] sm:$0xff]
  %v114 = vld [vmem:[%s78 + $0x118] sm:$0xff]
  %v115 = vld [vmem:[%s78 + $0x120] sm:$0xff]
  %v116 = vld [vmem:[%s78 + $0x128] sm:$0xff]
  %v117 = vld [vmem:[%s78 + $0x130] sm:$0xff]
  %v118 = vld [vmem:[%s78 + $0x138] sm:$0xff]
  %v119 = vld [vmem:[%s78 + $0x140] sm:$0xff]
  %v120 = vld [vmem:[%s78 + $0x148] sm:$0xff]
  %v121 = vld [vmem:[%s78 + $0x150] sm:$0xff]
  %v122 = vld [vmem:[%s78 + $0x158] sm:$0xff]
  %v123 = vld [vmem:[%s78 + $0x160] sm:$0xff]
  %v124 = vld [vmem:[%s78 + $0x168] sm:$0xff]
  %v125 = vld [vmem:[%s78 + $0x170] sm:$0xff]
  %v126 = vld [vmem:[%s78 + $0x178] sm:$0xff]
  %v127 = vld [vmem:[%s78 + $0x180] sm:$0xff]
  %v128 = vld [vmem:[%s78 + $0x188] sm:$0xff]
  %v129 = vld [vmem:[%s78 + $0x190] sm:$0xff]
  %v130 = vld [vmem:[%s78 + $0x198] sm:$0xff]
  %v131 = vld [vmem:[%s78 + $0x1a0] sm:$0xff]
  %v132 = vld [vmem:[%s78 + $0x1a8] sm:$0xff]
  %v133 = vld [vmem:[%s78 + $0x1b0] sm:$0xff]
  %v134 = vld [vmem:[%s78 + $0x1b8] sm:$0xff]
  %v135 = vld [vmem:[%s78 + $0x1c0] sm:$0xff]
  %v136 = vld [vmem:[%s78 + $0x1c8] sm:$0xff]
  %v137 = vld [vmem:[%s78 + $0x1d0] sm:$0xff]
  %v138 = vld [vmem:[%s78 + $0x1d8] sm:$0xff]
  %v139 = vld [vmem:[%s78 + $0x1e0] sm:$0xff]
  %v140 = vld [vmem:[%s78 + $0x1e8] sm:$0xff]
  %v141 = vld [vmem:[%s78 + $0x1f0] sm:$0xff]
  %v142 = vld [vmem:[%s78 + $0x1f8] sm:$0xff]
  %s143 = scalar_lea.vmem %s2, 3
  %v144 = vld [vmem:[%s143] ss:$8 sm:$0xf]
  %v145 = vld [vmem:[%s2 + $0x4] ss:$0 sm:$0xff]
  %v146 = vld [vmem:[%s2 + $0x20] sm:$0xff]
  %v147 = vld [vmem:[%s2 + $0x40] sm:$0xff]
  %v148 = vld [vmem:[%s2 + $0x60] sm:$0xff]
  %v149 = vld [vmem:[%s2 + $0x80] sm:$0xff]
  %v150 = vld [vmem:[%s2 + $0xa0] sm:$0xff]
  %v151 = vld [vmem:[%s2 + $0xc0] sm:$0xff]
  %v152 = vld [vmem:[%s2 + $0xe0] sm:$0xff]
  %v153 = vld [vmem:[%s2 + $0x100] sm:$0xff]
  %v154 = vld [vmem:[%s2 + $0x120] sm:$0xff]
  %v155 = vld [vmem:[%s2 + $0x140] sm:$0xff]
  %v156 = vld [vmem:[%s2 + $0x160] sm:$0xff]
  %v157 = vld [vmem:[%s2 + $0x180] sm:$0xff]
  %v158 = vld [vmem:[%s2 + $0x1a0] sm:$0xff]
  %v159 = vld [vmem:[%s2 + $0x1c0] sm:$0xff]
  %v160 = vld [vmem:[%s2 + $0x1e0] sm:$0xff]
  %v161 = vld [vmem:[%s2 + $0x200] sm:$0xff]
  %v162 = vld [vmem:[%s0] sm:$0x3]
  %s163 = scalar_lea.vmem %s2, 2
  %v164 = vld [vmem:[%s163] ss:$8 sm:$0xf]
  %v165 = vld [vmem:[%s2] ss:$8 sm:$0xf]
  %167 = vset.pattern.permute.xlu0 0
  %168 = vperm.xlu0 %167, %v162
  %v169 = vpop.permute.xlu0 %168
  %v172 = vperm.slane %v165, 0
  %v173 = vperm.slane %v165, 1
  %v174 = vperm.slane %v165, 2
  %v175 = vperm.slane %v165, 3
  %v180 = vmul.f32 %v169, %v172
  %v181 = vmul.f32 %v169, %v173
  %v182 = vmul.f32 %v169, %v174
  %v183 = vmul.f32 %v169, %v175
  %v185 = vperm.slane %v164, 0
  %v186 = vperm.slane %v164, 1
  %v187 = vperm.slane %v164, 2
  %v188 = vperm.slane %v164, 3
  %v193 = vadd.f32 %v185, %v180
  %v194 = vadd.f32 %v186, %v181
  %v195 = vadd.f32 %v187, %v182
  %v196 = vadd.f32 %v188, %v183
  %s197 = scalar_lea.vmem %s2, 1
  %v198 = vld [vmem:[%s197] ss:$8 sm:$0xf]
  %199 = vset.pattern.permute.xlu0 1
  %200 = vperm.xlu0 %199, %v162
  %v201 = vpop.permute.xlu0 %200
  %v204 = vperm.slane %v198, 0
  %v205 = vperm.slane %v198, 1
  %v206 = vperm.slane %v198, 2
  %v207 = vperm.slane %v198, 3
  %v212 = vmul.f32 %v201, %v204
  %v213 = vmul.f32 %v201, %v205
  %v214 = vmul.f32 %v201, %v206
  %v215 = vmul.f32 %v201, %v207
  %v216 = vadd.f32 %v193, %v212
  %v217 = vadd.f32 %v194, %v213
  %v218 = vadd.f32 %v195, %v214
  %v219 = vadd.f32 %v196, %v215
  %v220 = vmul.f32 %v216, 0.5
  %v221 = vtanh.pop %v220
  %v222 = vmul.f32 %v221, 0.5
  %v223 = vadd.f32 %v222, 0.5
  %v224 = vmul.f32 %v217, 0.5
  %v225 = vtanh.pop %v224
  %v226 = vmul.f32 %v225, 0.5
  %v227 = vadd.f32 %v226, 0.5
  %v228 = vtanh.pop %v218
  %v229 = vmul.f32 %v219, 0.5
  %v230 = vtanh.pop %v229
  %v231 = vmul.f32 %v230, 0.5
  %v232 = vadd.f32 %v231, 0.5
  %v233 = vmul.f32 %v227, 0.0
  %v234 = vmul.f32 %v223, %v228
  %v235 = vadd.f32 %v233, %v234
  %v236 = vtanh.pop %v235
  %v237 = vmul.f32 %v232, %v236
  %238 = vmatpush.msra.mxu0 %v161
  %239 = vmatpush.msra.mxu0 %v160
  %240 = vmatpush.msra.mxu0 %v159
  %241 = vmatpush.msra.mxu0 %v158
  %242 = vmatpush.msra.mxu0 %v157
  %243 = vmatpush.msra.mxu0 %v156
  %244 = vmatpush.msra.mxu0 %v155
  %245 = vmatpush.msra.mxu0 %v154
  %246 = vmatpush.msra.mxu0 %v153
  %247 = vmatpush.msra.mxu0 %v152
  %248 = vmatpush.msra.mxu0 %v151
  %249 = vmatpush.msra.mxu0 %v150
  %250 = vmatpush.msra.mxu0 %v149
  %251 = vmatpush.msra.mxu0 %v148
  %252 = vmatpush.msra.mxu0 %v147
  %253 = vmatpush.msra.mxu0 %v146
  %254 = vmatmul.f32.gmra.mxu0 %v237
  %v255 = vpop.f32.mrf.mxu0
  %v256 = vadd.f32 %v145, %v255
  %257 = vdwg.mxu0
  %vm258 = vcmask 9216
  %259 = vst.msk [vmem:[%s3] sm:$0x3] %vm258, %v256
  %260 = vmatpush.msra.mxu0 %v139
  %261 = vmatpush.msra.mxu0 %v135
  %262 = vmatpush.msra.mxu0 %v131
  %263 = vmatpush.msra.mxu0 %v127
  %264 = vmatpush.msra.mxu0 %v123
  %265 = vmatpush.msra.mxu0 %v119
  %266 = vmatpush.msra.mxu0 %v115
  %267 = vmatpush.msra.mxu0 %v111
  %268 = vmatpush.msra.mxu0 %v107
  %269 = vmatpush.msra.mxu0 %v103
  %270 = vmatpush.msra.mxu0 %v99
  %271 = vmatpush.msra.mxu0 %v95
  %272 = vmatpush.msra.mxu0 %v91
  %273 = vmatpush.msra.mxu0 %v87
  %274 = vmatpush.msra.mxu0 %v83
  %275 = vmatpush.msra.mxu0 %v79
  %276 = vmatmul.f32.gmra.mxu0 %v237
  %v277 = vpop.f32.mrf.mxu0
  %v278 = vadd.f32 0.0, %v277
  %279 = vdwg.mxu0
  %280 = vmatpush.msra.mxu0 %v140
  %281 = vmatpush.msra.mxu0 %v136
  %282 = vmatpush.msra.mxu0 %v132
  %283 = vmatpush.msra.mxu0 %v128
  %284 = vmatpush.msra.mxu0 %v124
  %285 = vmatpush.msra.mxu0 %v120
  %286 = vmatpush.msra.mxu0 %v116
  %287 = vmatpush.msra.mxu0 %v112
  %288 = vmatpush.msra.mxu0 %v108
  %289 = vmatpush.msra.mxu0 %v104
  %290 = vmatpush.msra.mxu0 %v100
  %291 = vmatpush.msra.mxu0 %v96
  %292 = vmatpush.msra.mxu0 %v92
  %293 = vmatpush.msra.mxu0 %v88
  %294 = vmatpush.msra.mxu0 %v84
  %295 = vmatpush.msra.mxu0 %v80
  %296 = vmatmul.f32.gmra.mxu0 %v237
  %v297 = vpop.f32.mrf.mxu0
  %v298 = vadd.f32 0.0, %v297
  %299 = vdwg.mxu0
  %300 = vmatpush.msra.mxu0 %v141
  %301 = vmatpush.msra.mxu0 %v137
  %302 = vmatpush.msra.mxu0 %v133
  %303 = vmatpush.msra.mxu0 %v129
  %304 = vmatpush.msra.mxu0 %v125
  %305 = vmatpush.msra.mxu0 %v121
  %306 = vmatpush.msra.mxu0 %v117
  %307 = vmatpush.msra.mxu0 %v113
  %308 = vmatpush.msra.mxu0 %v109
  %309 = vmatpush.msra.mxu0 %v105
  %310 = vmatpush.msra.mxu0 %v101
  %311 = vmatpush.msra.mxu0 %v97
  %312 = vmatpush.msra.mxu0 %v93
  %313 = vmatpush.msra.mxu0 %v89
  %314 = vmatpush.msra.mxu0 %v85
  %315 = vmatpush.msra.mxu0 %v81
  %316 = vmatmul.f32.gmra.mxu0 %v237
  %v317 = vpop.f32.mrf.mxu0
  %v318 = vadd.f32 0.0, %v317
  %319 = vdwg.mxu0
  %320 = vmatpush.msra.mxu0 %v142
  %321 = vmatpush.msra.mxu0 %v138
  %322 = vmatpush.msra.mxu0 %v134
  %323 = vmatpush.msra.mxu0 %v130
  %324 = vmatpush.msra.mxu0 %v126
  %325 = vmatpush.msra.mxu0 %v122
  %326 = vmatpush.msra.mxu0 %v118
  %327 = vmatpush.msra.mxu0 %v114
  %328 = vmatpush.msra.mxu0 %v110
  %329 = vmatpush.msra.mxu0 %v106
  %330 = vmatpush.msra.mxu0 %v102
  %331 = vmatpush.msra.mxu0 %v98
  %332 = vmatpush.msra.mxu0 %v94
  %333 = vmatpush.msra.mxu0 %v90
  %334 = vmatpush.msra.mxu0 %v86
  %335 = vmatpush.msra.mxu0 %v82
  %336 = vmatmul.f32.gmra.mxu0 %v237
  %v337 = vpop.f32.mrf.mxu0
  %v338 = vadd.f32 0.0, %v337
  %339 = vdwg.mxu0
  %v341 = vperm.slane %v144, 0
  %v342 = vperm.slane %v144, 1
  %v343 = vperm.slane %v144, 2
  %v344 = vperm.slane %v144, 3
  %v349 = vadd.f32 %v341, %v278
  %v350 = vadd.f32 %v342, %v298
  %v351 = vadd.f32 %v343, %v318
  %v352 = vadd.f32 %v344, %v338
  %v353 = vmul.f32 %v349, 0.5
  %v354 = vtanh.pop %v353
  %v355 = vmul.f32 %v354, 0.5
  %v356 = vadd.f32 %v355, 0.5
  %v357 = vmul.f32 %v350, 0.5
  %v358 = vtanh.pop %v357
  %v359 = vmul.f32 %v358, 0.5
  %v360 = vadd.f32 %v359, 0.5
  %v361 = vtanh.pop %v351
  %v362 = vmul.f32 %v352, 0.5
  %v363 = vtanh.pop %v362
  %v364 = vmul.f32 %v363, 0.5
  %v365 = vadd.f32 %v364, 0.5
  %v366 = vmul.f32 %v360, %v235
  %v367 = vmul.f32 %v356, %v361
  %v368 = vadd.f32 %v366, %v367
  %v369 = vtanh.pop %v368
  %v370 = vmul.f32 %v365, %v369
  %371 = vmatpush.msra.mxu0 %v161
  %372 = vmatpush.msra.mxu0 %v160
  %373 = vmatpush.msra.mxu0 %v159
  %374 = vmatpush.msra.mxu0 %v158
  %375 = vmatpush.msra.mxu0 %v157
  %376 = vmatpush.msra.mxu0 %v156
  %377 = vmatpush.msra.mxu0 %v155
  %378 = vmatpush.msra.mxu0 %v154
  %379 = vmatpush.msra.mxu0 %v153
  %380 = vmatpush.msra.mxu0 %v152
  %381 = vmatpush.msra.mxu0 %v151
  %382 = vmatpush.msra.mxu0 %v150
  %383 = vmatpush.msra.mxu0 %v149
  %384 = vmatpush.msra.mxu0 %v148
  %385 = vmatpush.msra.mxu0 %v147
  %386 = vmatpush.msra.mxu0 %v146
  %387 = vmatmul.f32.gmra.mxu0 %v370
  %v388 = vpop.f32.mrf.mxu0
  %v389 = vadd.f32 %v145, %v388
  %390 = vdwg.mxu0
  %s391 = scalar_lea.vmem %s3, 2
  %392 = vst.msk [vmem:[%s391] sm:$0x3] %vm258, %v389
  %393 = vmatpush.msra.mxu0 %v139
  %394 = vmatpush.msra.mxu0 %v135
  %395 = vmatpush.msra.mxu0 %v131
  %396 = vmatpush.msra.mxu0 %v127
  %397 = vmatpush.msra.mxu0 %v123
  %398 = vmatpush.msra.mxu0 %v119
  %399 = vmatpush.msra.mxu0 %v115
  %400 = vmatpush.msra.mxu0 %v111
  %401 = vmatpush.msra.mxu0 %v107
  %402 = vmatpush.msra.mxu0 %v103
  %403 = vmatpush.msra.mxu0 %v99
  %404 = vmatpush.msra.mxu0 %v95
  %405 = vmatpush.msra.mxu0 %v91
  %406 = vmatpush.msra.mxu0 %v87
  %407 = vmatpush.msra.mxu0 %v83
  %408 = vmatpush.msra.mxu0 %v79
  %409 = vmatmul.f32.gmra.mxu0 %v370
  %v410 = vpop.f32.mrf.mxu0
  %v411 = vadd.f32 0.0, %v410
  %412 = vdwg.mxu0
  %413 = vmatpush.msra.mxu0 %v140
  %414 = vmatpush.msra.mxu0 %v136
  %415 = vmatpush.msra.mxu0 %v132
  %416 = vmatpush.msra.mxu0 %v128
  %417 = vmatpush.msra.mxu0 %v124
  %418 = vmatpush.msra.mxu0 %v120
  %419 = vmatpush.msra.mxu0 %v116
  %420 = vmatpush.msra.mxu0 %v112
  %421 = vmatpush.msra.mxu0 %v108
  %422 = vmatpush.msra.mxu0 %v104
  %423 = vmatpush.msra.mxu0 %v100
  %424 = vmatpush.msra.mxu0 %v96
  %425 = vmatpush.msra.mxu0 %v92
  %426 = vmatpush.msra.mxu0 %v88
  %427 = vmatpush.msra.mxu0 %v84
  %428 = vmatpush.msra.mxu0 %v80
  %429 = vmatmul.f32.gmra.mxu0 %v370
  %v430 = vpop.f32.mrf.mxu0
  %v431 = vadd.f32 0.0, %v430
  %432 = vdwg.mxu0
  %433 = vmatpush.msra.mxu0 %v141
  %434 = vmatpush.msra.mxu0 %v137
  %435 = vmatpush.msra.mxu0 %v133
  %436 = vmatpush.msra.mxu0 %v129
  %437 = vmatpush.msra.mxu0 %v125
  %438 = vmatpush.msra.mxu0 %v121
  %439 = vmatpush.msra.mxu0 %v117
  %440 = vmatpush.msra.mxu0 %v113
  %441 = vmatpush.msra.mxu0 %v109
  %442 = vmatpush.msra.mxu0 %v105
  %443 = vmatpush.msra.mxu0 %v101
  %444 = vmatpush.msra.mxu0 %v97
  %445 = vmatpush.msra.mxu0 %v93
  %446 = vmatpush.msra.mxu0 %v89
  %447 = vmatpush.msra.mxu0 %v85
  %448 = vmatpush.msra.mxu0 %v81
  %449 = vmatmul.f32.gmra.mxu0 %v370
  %v450 = vpop.f32.mrf.mxu0
  %v451 = vadd.f32 0.0, %v450
  %452 = vdwg.mxu0
  %453 = vmatpush.msra.mxu0 %v142
  %454 = vmatpush.msra.mxu0 %v138
  %455 = vmatpush.msra.mxu0 %v134
  %456 = vmatpush.msra.mxu0 %v130
  %457 = vmatpush.msra.mxu0 %v126
  %458 = vmatpush.msra.mxu0 %v122
  %459 = vmatpush.msra.mxu0 %v118
  %460 = vmatpush.msra.mxu0 %v114
  %461 = vmatpush.msra.mxu0 %v110
  %462 = vmatpush.msra.mxu0 %v106
  %463 = vmatpush.msra.mxu0 %v102
  %464 = vmatpush.msra.mxu0 %v98
  %465 = vmatpush.msra.mxu0 %v94
  %466 = vmatpush.msra.mxu0 %v90
  %467 = vmatpush.msra.mxu0 %v86
  %468 = vmatpush.msra.mxu0 %v82
  %469 = vmatmul.f32.gmra.mxu0 %v370
  %v470 = vpop.f32.mrf.mxu0
  %v471 = vadd.f32 0.0, %v470
  %472 = vdwg.mxu0
  %v473 = vadd.f32 %v341, %v411
  %v474 = vadd.f32 %v342, %v431
  %v475 = vadd.f32 %v343, %v451
  %v476 = vadd.f32 %v344, %v471
  %v477 = vmul.f32 %v473, 0.5
  %v478 = vtanh.pop %v477
  %v479 = vmul.f32 %v478, 0.5
  %v480 = vadd.f32 %v479, 0.5
  %v481 = vmul.f32 %v474, 0.5
  %v482 = vtanh.pop %v481
  %v483 = vmul.f32 %v482, 0.5
  %v484 = vadd.f32 %v483, 0.5
  %v485 = vtanh.pop %v475
  %v486 = vmul.f32 %v476, 0.5
  %v487 = vtanh.pop %v486
  %v488 = vmul.f32 %v487, 0.5
  %v489 = vadd.f32 %v488, 0.5
  %v490 = vmul.f32 %v484, %v368
  %v491 = vmul.f32 %v480, %v485
  %v492 = vadd.f32 %v490, %v491
  %v493 = vtanh.pop %v492
  %v494 = vmul.f32 %v489, %v493
  %495 = vmatpush.msra.mxu0 %v161
  %496 = vmatpush.msra.mxu0 %v160
  %497 = vmatpush.msra.mxu0 %v159
  %498 = vmatpush.msra.mxu0 %v158
  %499 = vmatpush.msra.mxu0 %v157
  %500 = vmatpush.msra.mxu0 %v156
  %501 = vmatpush.msra.mxu0 %v155
  %502 = vmatpush.msra.mxu0 %v154
  %503 = vmatpush.msra.mxu0 %v153
  %504 = vmatpush.msra.mxu0 %v152
  %505 = vmatpush.msra.mxu0 %v151
  %506 = vmatpush.msra.mxu0 %v150
  %507 = vmatpush.msra.mxu0 %v149
  %508 = vmatpush.msra.mxu0 %v148
  %509 = vmatpush.msra.mxu0 %v147
  %510 = vmatpush.msra.mxu0 %v146
  %511 = vmatmul.f32.gmra.mxu0 %v494
  %v512 = vpop.f32.mrf.mxu0
  %v513 = vadd.f32 %v145, %v512
  %514 = vdwg.mxu0
  %s515 = scalar_lea.vmem %s3, 4
  %516 = vst.msk [vmem:[%s515] sm:$0x3] %vm258, %v513
  %s517 = scalar_lea.vmem %s0, 6
  %v518 = vld [vmem:[%s517] sm:$0x3]
  %v519 = vld [vmem:[%s163] ss:$8 sm:$0xf]
  %v520 = vld [vmem:[%s2] ss:$8 sm:$0xf]
  %522 = vset.pattern.permute.xlu0 0
  %523 = vperm.xlu0 %522, %v518
  %v524 = vpop.permute.xlu0 %523
  %v527 = vperm.slane %v520, 0
  %v528 = vperm.slane %v520, 1
  %v529 = vperm.slane %v520, 2
  %v530 = vperm.slane %v520, 3
  %v535 = vmul.f32 %v524, %v527
  %v536 = vmul.f32 %v524, %v528
  %v537 = vmul.f32 %v524, %v529
  %v538 = vmul.f32 %v524, %v530
  %v540 = vperm.slane %v519, 0
  %v541 = vperm.slane %v519, 1
  %v542 = vperm.slane %v519, 2
  %v543 = vperm.slane %v519, 3
  %v548 = vadd.f32 %v540, %v535
  %v549 = vadd.f32 %v541, %v536
  %v550 = vadd.f32 %v542, %v537
  %v551 = vadd.f32 %v543, %v538
  %v552 = vld [vmem:[%s197] ss:$8 sm:$0xf]
  %553 = vset.pattern.permute.xlu0 1
  %554 = vperm.xlu0 %553, %v518
  %v555 = vpop.permute.xlu0 %554
  %v558 = vperm.slane %v552, 0
  %v559 = vperm.slane %v552, 1
  %v560 = vperm.slane %v552, 2
  %v561 = vperm.slane %v552, 3
  %v566 = vmul.f32 %v555, %v558
  %v567 = vmul.f32 %v555, %v559
  %v568 = vmul.f32 %v555, %v560
  %v569 = vmul.f32 %v555, %v561
  %v570 = vadd.f32 %v548, %v566
  %v571 = vadd.f32 %v549, %v567
  %v572 = vadd.f32 %v550, %v568
  %v573 = vadd.f32 %v551, %v569
  %574 = vmatpush.msra.mxu0 %v74
  %575 = vmatpush.msra.mxu0 %v70
  %576 = vmatpush.msra.mxu0 %v66
  %577 = vmatpush.msra.mxu0 %v62
  %578 = vmatpush.msra.mxu0 %v58
  %579 = vmatpush.msra.mxu0 %v54
  %580 = vmatpush.msra.mxu0 %v50
  %581 = vmatpush.msra.mxu0 %v46
  %582 = vmatpush.msra.mxu0 %v42
  %583 = vmatpush.msra.mxu0 %v38
  %584 = vmatpush.msra.mxu0 %v34
  %585 = vmatpush.msra.mxu0 %v30
  %586 = vmatpush.msra.mxu0 %v26
  %587 = vmatpush.msra.mxu0 %v22
  %588 = vmatpush.msra.mxu0 %v18
  %589 = vmatpush.msra.mxu0 %v14
  %590 = vmatmul.f32.gmra.mxu0 %v494
  %v591 = vpop.f32.mrf.mxu0
  %v592 = vadd.f32 0.0, %v591
  %593 = vdwg.mxu0
  %594 = vmatpush.msra.mxu0 %v75
  %595 = vmatpush.msra.mxu0 %v71
  %596 = vmatpush.msra.mxu0 %v67
  %597 = vmatpush.msra.mxu0 %v63
  %598 = vmatpush.msra.mxu0 %v59
  %599 = vmatpush.msra.mxu0 %v55
  %600 = vmatpush.msra.mxu0 %v51
  %601 = vmatpush.msra.mxu0 %v47
  %602 = vmatpush.msra.mxu0 %v43
  %603 = vmatpush.msra.mxu0 %v39
  %604 = vmatpush.msra.mxu0 %v35
  %605 = vmatpush.msra.mxu0 %v31
  %606 = vmatpush.msra.mxu0 %v27
  %607 = vmatpush.msra.mxu0 %v23
  %608 = vmatpush.msra.mxu0 %v19
  %609 = vmatpush.msra.mxu0 %v15
  %610 = vmatmul.f32.gmra.mxu0 %v494
  %v611 = vpop.f32.mrf.mxu0
  %v612 = vadd.f32 0.0, %v611
  %613 = vdwg.mxu0
  %614 = vmatpush.msra.mxu0 %v76
  %615 = vmatpush.msra.mxu0 %v72
  %616 = vmatpush.msra.mxu0 %v68
  %617 = vmatpush.msra.mxu0 %v64
  %618 = vmatpush.msra.mxu0 %v60
  %619 = vmatpush.msra.mxu0 %v56
  %620 = vmatpush.msra.mxu0 %v52
  %621 = vmatpush.msra.mxu0 %v48
  %622 = vmatpush.msra.mxu0 %v44
  %623 = vmatpush.msra.mxu0 %v40
  %624 = vmatpush.msra.mxu0 %v36
  %625 = vmatpush.msra.mxu0 %v32
  %626 = vmatpush.msra.mxu0 %v28
  %627 = vmatpush.msra.mxu0 %v24
  %628 = vmatpush.msra.mxu0 %v20
  %629 = vmatpush.msra.mxu0 %v16
  %630 = vmatmul.f32.gmra.mxu0 %v494
  %v631 = vpop.f32.mrf.mxu0
  %v632 = vadd.f32 0.0, %v631
  %633 = vdwg.mxu0
  %634 = vmatpush.msra.mxu0 %v77
  %635 = vmatpush.msra.mxu0 %v73
  %636 = vmatpush.msra.mxu0 %v69
  %637 = vmatpush.msra.mxu0 %v65
  %638 = vmatpush.msra.mxu0 %v61
  %639 = vmatpush.msra.mxu0 %v57
  %640 = vmatpush.msra.mxu0 %v53
  %641 = vmatpush.msra.mxu0 %v49
  %642 = vmatpush.msra.mxu0 %v45
  %643 = vmatpush.msra.mxu0 %v41
  %644 = vmatpush.msra.mxu0 %v37
  %645 = vmatpush.msra.mxu0 %v33
  %646 = vmatpush.msra.mxu0 %v29
  %647 = vmatpush.msra.mxu0 %v25
  %648 = vmatpush.msra.mxu0 %v21
  %649 = vmatpush.msra.mxu0 %v17
  %650 = vmatmul.f32.gmra.mxu0 %v494
  %v651 = vpop.f32.mrf.mxu0
  %v652 = vadd.f32 0.0, %v651
  %653 = vdwg.mxu0
  %v654 = vadd.f32 %v570, %v592
  %v655 = vadd.f32 %v571, %v612
  %v656 = vadd.f32 %v572, %v632
  %v657 = vadd.f32 %v573, %v652
  %v658 = vmul.f32 %v654, 0.5
  %v659 = vtanh.pop %v658
  %v660 = vmul.f32 %v659, 0.5
  %v661 = vadd.f32 %v660, 0.5
  %v662 = vmul.f32 %v655, 0.5
  %v663 = vtanh.pop %v662
  %v664 = vmul.f32 %v663, 0.5
  %v665 = vadd.f32 %v664, 0.5
  %v666 = vtanh.pop %v656
  %v667 = vmul.f32 %v657, 0.5
  %v668 = vtanh.pop %v667
  %v669 = vmul.f32 %v668, 0.5
  %v670 = vadd.f32 %v669, 0.5
  %v671 = vmul.f32 %v665, %v492
  %v672 = vmul.f32 %v661, %v666
  %v673 = vadd.f32 %v671, %v672
  %v674 = vtanh.pop %v673
  %v675 = vmul.f32 %v670, %v674
  %676 = vmatpush.msra.mxu0 %v161
  %677 = vmatpush.msra.mxu0 %v160
  %678 = vmatpush.msra.mxu0 %v159
  %679 = vmatpush.msra.mxu0 %v158
  %680 = vmatpush.msra.mxu0 %v157
  %681 = vmatpush.msra.mxu0 %v156
  %682 = vmatpush.msra.mxu0 %v155
  %683 = vmatpush.msra.mxu0 %v154
  %684 = vmatpush.msra.mxu0 %v153
  %685 = vmatpush.msra.mxu0 %v152
  %686 = vmatpush.msra.mxu0 %v151
  %687 = vmatpush.msra.mxu0 %v150
  %688 = vmatpush.msra.mxu0 %v149
  %689 = vmatpush.msra.mxu0 %v148
  %690 = vmatpush.msra.mxu0 %v147
  %691 = vmatpush.msra.mxu0 %v146
  %692 = vmatmul.f32.gmra.mxu0 %v675
  %v693 = vpop.f32.mrf.mxu0
  %v694 = vadd.f32 %v145, %v693
  %695 = vdwg.mxu0
  %s696 = scalar_lea.vmem %s3, 6
  %697 = vst.msk [vmem:[%s696] sm:$0x3] %vm258, %v694
  %698 = vmatpush.msra.mxu0 %v139
  %699 = vmatpush.msra.mxu0 %v135
  %700 = vmatpush.msra.mxu0 %v131
  %701 = vmatpush.msra.mxu0 %v127
  %702 = vmatpush.msra.mxu0 %v123
  %703 = vmatpush.msra.mxu0 %v119
  %704 = vmatpush.msra.mxu0 %v115
  %705 = vmatpush.msra.mxu0 %v111
  %706 = vmatpush.msra.mxu0 %v107
  %707 = vmatpush.msra.mxu0 %v103
  %708 = vmatpush.msra.mxu0 %v99
  %709 = vmatpush.msra.mxu0 %v95
  %710 = vmatpush.msra.mxu0 %v91
  %711 = vmatpush.msra.mxu0 %v87
  %712 = vmatpush.msra.mxu0 %v83
  %713 = vmatpush.msra.mxu0 %v79
  %714 = vmatmul.f32.gmra.mxu0 %v675
  %v715 = vpop.f32.mrf.mxu0
  %v716 = vadd.f32 0.0, %v715
  %717 = vdwg.mxu0
  %718 = vmatpush.msra.mxu0 %v140
  %719 = vmatpush.msra.mxu0 %v136
  %720 = vmatpush.msra.mxu0 %v132
  %721 = vmatpush.msra.mxu0 %v128
  %722 = vmatpush.msra.mxu0 %v124
  %723 = vmatpush.msra.mxu0 %v120
  %724 = vmatpush.msra.mxu0 %v116
  %725 = vmatpush.msra.mxu0 %v112
  %726 = vmatpush.msra.mxu0 %v108
  %727 = vmatpush.msra.mxu0 %v104
  %728 = vmatpush.msra.mxu0 %v100
  %729 = vmatpush.msra.mxu0 %v96
  %730 = vmatpush.msra.mxu0 %v92
  %731 = vmatpush.msra.mxu0 %v88
  %732 = vmatpush.msra.mxu0 %v84
  %733 = vmatpush.msra.mxu0 %v80
  %734 = vmatmul.f32.gmra.mxu0 %v675
  %v735 = vpop.f32.mrf.mxu0
  %v736 = vadd.f32 0.0, %v735
  %737 = vdwg.mxu0
  %738 = vmatpush.msra.mxu0 %v141
  %739 = vmatpush.msra.mxu0 %v137
  %740 = vmatpush.msra.mxu0 %v133
  %741 = vmatpush.msra.mxu0 %v129
  %742 = vmatpush.msra.mxu0 %v125
  %743 = vmatpush.msra.mxu0 %v121
  %744 = vmatpush.msra.mxu0 %v117
  %745 = vmatpush.msra.mxu0 %v113
  %746 = vmatpush.msra.mxu0 %v109
  %747 = vmatpush.msra.mxu0 %v105
  %748 = vmatpush.msra.mxu0 %v101
  %749 = vmatpush.msra.mxu0 %v97
  %750 = vmatpush.msra.mxu0 %v93
  %751 = vmatpush.msra.mxu0 %v89
  %752 = vmatpush.msra.mxu0 %v85
  %753 = vmatpush.msra.mxu0 %v81
  %754 = vmatmul.f32.gmra.mxu0 %v675
  %v755 = vpop.f32.mrf.mxu0
  %v756 = vadd.f32 0.0, %v755
  %757 = vdwg.mxu0
  %758 = vmatpush.msra.mxu0 %v142
  %759 = vmatpush.msra.mxu0 %v138
  %760 = vmatpush.msra.mxu0 %v134
  %761 = vmatpush.msra.mxu0 %v130
  %762 = vmatpush.msra.mxu0 %v126
  %763 = vmatpush.msra.mxu0 %v122
  %764 = vmatpush.msra.mxu0 %v118
  %765 = vmatpush.msra.mxu0 %v114
  %766 = vmatpush.msra.mxu0 %v110
  %767 = vmatpush.msra.mxu0 %v106
  %768 = vmatpush.msra.mxu0 %v102
  %769 = vmatpush.msra.mxu0 %v98
  %770 = vmatpush.msra.mxu0 %v94
  %771 = vmatpush.msra.mxu0 %v90
  %772 = vmatpush.msra.mxu0 %v86
  %773 = vmatpush.msra.mxu0 %v82
  %774 = vmatmul.f32.gmra.mxu0 %v675
  %v775 = vpop.f32.mrf.mxu0
  %v776 = vadd.f32 0.0, %v775
  %777 = vdwg.mxu0
  %v778 = vadd.f32 %v341, %v716
  %v779 = vadd.f32 %v342, %v736
  %v780 = vadd.f32 %v343, %v756
  %v781 = vadd.f32 %v344, %v776
  %v782 = vmul.f32 %v778, 0.5
  %v783 = vtanh.pop %v782
  %v784 = vmul.f32 %v783, 0.5
  %v785 = vadd.f32 %v784, 0.5
  %v786 = vmul.f32 %v779, 0.5
  %v787 = vtanh.pop %v786
  %v788 = vmul.f32 %v787, 0.5
  %v789 = vadd.f32 %v788, 0.5
  %v790 = vtanh.pop %v780
  %v791 = vmul.f32 %v781, 0.5
  %v792 = vtanh.pop %v791
  %v793 = vmul.f32 %v792, 0.5
  %v794 = vadd.f32 %v793, 0.5
  %v795 = vmul.f32 %v789, %v673
  %v796 = vmul.f32 %v785, %v790
  %v797 = vadd.f32 %v795, %v796
  %v798 = vtanh.pop %v797
  %v799 = vmul.f32 %v794, %v798
  %800 = vmatpush.msra.mxu0 %v161
  %801 = vmatpush.msra.mxu0 %v160
  %802 = vmatpush.msra.mxu0 %v159
  %803 = vmatpush.msra.mxu0 %v158
  %804 = vmatpush.msra.mxu0 %v157
  %805 = vmatpush.msra.mxu0 %v156
  %806 = vmatpush.msra.mxu0 %v155
  %807 = vmatpush.msra.mxu0 %v154
  %808 = vmatpush.msra.mxu0 %v153
  %809 = vmatpush.msra.mxu0 %v152
  %810 = vmatpush.msra.mxu0 %v151
  %811 = vmatpush.msra.mxu0 %v150
  %812 = vmatpush.msra.mxu0 %v149
  %813 = vmatpush.msra.mxu0 %v148
  %814 = vmatpush.msra.mxu0 %v147
  %815 = vmatpush.msra.mxu0 %v146
  %816 = vmatmul.f32.gmra.mxu0 %v799
  %v817 = vpop.f32.mrf.mxu0
  %v818 = vadd.f32 %v145, %v817
  %819 = vdwg.mxu0
  %s820 = scalar_lea.vmem %s3, 8
  %821 = vst.msk [vmem:[%s820] sm:$0x3] %vm258, %v818
  %822 = vmatpush.msra.mxu0 %v139
  %823 = vmatpush.msra.mxu0 %v135
  %824 = vmatpush.msra.mxu0 %v131
  %825 = vmatpush.msra.mxu0 %v127
  %826 = vmatpush.msra.mxu0 %v123
  %827 = vmatpush.msra.mxu0 %v119
  %828 = vmatpush.msra.mxu0 %v115
  %829 = vmatpush.msra.mxu0 %v111
  %830 = vmatpush.msra.mxu0 %v107
  %831 = vmatpush.msra.mxu0 %v103
  %832 = vmatpush.msra.mxu0 %v99
  %833 = vmatpush.msra.mxu0 %v95
  %834 = vmatpush.msra.mxu0 %v91
  %835 = vmatpush.msra.mxu0 %v87
  %836 = vmatpush.msra.mxu0 %v83
  %837 = vmatpush.msra.mxu0 %v79
  %838 = vmatmul.f32.gmra.mxu0 %v799
  %v839 = vpop.f32.mrf.mxu0
  %v840 = vadd.f32 0.0, %v839
  %841 = vdwg.mxu0
  %842 = vmatpush.msra.mxu0 %v140
  %843 = vmatpush.msra.mxu0 %v136
  %844 = vmatpush.msra.mxu0 %v132
  %845 = vmatpush.msra.mxu0 %v128
  %846 = vmatpush.msra.mxu0 %v124
  %847 = vmatpush.msra.mxu0 %v120
  %848 = vmatpush.msra.mxu0 %v116
  %849 = vmatpush.msra.mxu0 %v112
  %850 = vmatpush.msra.mxu0 %v108
  %851 = vmatpush.msra.mxu0 %v104
  %852 = vmatpush.msra.mxu0 %v100
  %853 = vmatpush.msra.mxu0 %v96
  %854 = vmatpush.msra.mxu0 %v92
  %855 = vmatpush.msra.mxu0 %v88
  %856 = vmatpush.msra.mxu0 %v84
  %857 = vmatpush.msra.mxu0 %v80
  %858 = vmatmul.f32.gmra.mxu0 %v799
  %v859 = vpop.f32.mrf.mxu0
  %v860 = vadd.f32 0.0, %v859
  %861 = vdwg.mxu0
  %862 = vmatpush.msra.mxu0 %v141
  %863 = vmatpush.msra.mxu0 %v137
  %864 = vmatpush.msra.mxu0 %v133
  %865 = vmatpush.msra.mxu0 %v129
  %866 = vmatpush.msra.mxu0 %v125
  %867 = vmatpush.msra.mxu0 %v121
  %868 = vmatpush.msra.mxu0 %v117
  %869 = vmatpush.msra.mxu0 %v113
  %870 = vmatpush.msra.mxu0 %v109
  %871 = vmatpush.msra.mxu0 %v105
  %872 = vmatpush.msra.mxu0 %v101
  %873 = vmatpush.msra.mxu0 %v97
  %874 = vmatpush.msra.mxu0 %v93
  %875 = vmatpush.msra.mxu0 %v89
  %876 = vmatpush.msra.mxu0 %v85
  %877 = vmatpush.msra.mxu0 %v81
  %878 = vmatmul.f32.gmra.mxu0 %v799
  %v879 = vpop.f32.mrf.mxu0
  %v880 = vadd.f32 0.0, %v879
  %881 = vdwg.mxu0
  %882 = vmatpush.msra.mxu0 %v142
  %883 = vmatpush.msra.mxu0 %v138
  %884 = vmatpush.msra.mxu0 %v134
  %885 = vmatpush.msra.mxu0 %v130
  %886 = vmatpush.msra.mxu0 %v126
  %887 = vmatpush.msra.mxu0 %v122
  %888 = vmatpush.msra.mxu0 %v118
  %889 = vmatpush.msra.mxu0 %v114
  %890 = vmatpush.msra.mxu0 %v110
  %891 = vmatpush.msra.mxu0 %v106
  %892 = vmatpush.msra.mxu0 %v102
  %893 = vmatpush.msra.mxu0 %v98
  %894 = vmatpush.msra.mxu0 %v94
  %895 = vmatpush.msra.mxu0 %v90
  %896 = vmatpush.msra.mxu0 %v86
  %897 = vmatpush.msra.mxu0 %v82
  %898 = vmatmul.f32.gmra.mxu0 %v799
  %v899 = vpop.f32.mrf.mxu0
  %v900 = vadd.f32 0.0, %v899
  %901 = vdwg.mxu0
  %v902 = vadd.f32 %v341, %v840
  %v903 = vadd.f32 %v342, %v860
  %v904 = vadd.f32 %v343, %v880
  %v905 = vadd.f32 %v344, %v900
  %v906 = vmul.f32 %v902, 0.5
  %v907 = vtanh.pop %v906
  %v908 = vmul.f32 %v907, 0.5
  %v909 = vadd.f32 %v908, 0.5
  %v910 = vmul.f32 %v903, 0.5
  %v911 = vtanh.pop %v910
  %v912 = vmul.f32 %v911, 0.5
  %v913 = vadd.f32 %v912, 0.5
  %v914 = vtanh.pop %v904
  %v915 = vmul.f32 %v905, 0.5
  %v916 = vtanh.pop %v915
  %v917 = vmul.f32 %v916, 0.5
  %v918 = vadd.f32 %v917, 0.5
  %v919 = vmul.f32 %v913, %v797
  %v920 = vmul.f32 %v909, %v914
  %v921 = vadd.f32 %v919, %v920
  %v922 = vtanh.pop %v921
  %v923 = vmul.f32 %v918, %v922
  %924 = vmatpush.msra.mxu0 %v161
  %925 = vmatpush.msra.mxu0 %v160
  %926 = vmatpush.msra.mxu0 %v159
  %927 = vmatpush.msra.mxu0 %v158
  %928 = vmatpush.msra.mxu0 %v157
  %929 = vmatpush.msra.mxu0 %v156
  %930 = vmatpush.msra.mxu0 %v155
  %931 = vmatpush.msra.mxu0 %v154
  %932 = vmatpush.msra.mxu0 %v153
  %933 = vmatpush.msra.mxu0 %v152
  %934 = vmatpush.msra.mxu0 %v151
  %935 = vmatpush.msra.mxu0 %v150
  %936 = vmatpush.msra.mxu0 %v149
  %937 = vmatpush.msra.mxu0 %v148
  %938 = vmatpush.msra.mxu0 %v147
  %939 = vmatpush.msra.mxu0 %v146
  %940 = vmatmul.f32.gmra.mxu0 %v923
  %v941 = vpop.f32.mrf.mxu0
  %v942 = vadd.f32 %v145, %v941
  %943 = vdwg.mxu0
  %s944 = scalar_lea.vmem %s3, 10
  %945 = vst.msk [vmem:[%s944] sm:$0x3] %vm258, %v942
  %s946 = scalar_lea.vmem %s0, 12
  %v947 = vld [vmem:[%s946] sm:$0x3]
  %v948 = vld [vmem:[%s163] ss:$8 sm:$0xf]
  %v949 = vld [vmem:[%s2] ss:$8 sm:$0xf]
  %951 = vset.pattern.permute.xlu0 0
  %952 = vperm.xlu0 %951, %v947
  %v953 = vpop.permute.xlu0 %952
  %v956 = vperm.slane %v949, 0
  %v957 = vperm.slane %v949, 1
  %v958 = vperm.slane %v949, 2
  %v959 = vperm.slane %v949, 3
  %v964 = vmul.f32 %v953, %v956
  %v965 = vmul.f32 %v953, %v957
  %v966 = vmul.f32 %v953, %v958
  %v967 = vmul.f32 %v953, %v959
  %v969 = vperm.slane %v948, 0
  %v970 = vperm.slane %v948, 1
  %v971 = vperm.slane %v948, 2
  %v972 = vperm.slane %v948, 3
  %v977 = vadd.f32 %v969, %v964
  %v978 = vadd.f32 %v970, %v965
  %v979 = vadd.f32 %v971, %v966
  %v980 = vadd.f32 %v972, %v967
  %v981 = vld [vmem:[%s197] ss:$8 sm:$0xf]
  %982 = vset.pattern.permute.xlu0 1
  %983 = vperm.xlu0 %982, %v947
  %v984 = vpop.permute.xlu0 %983
  %v987 = vperm.slane %v981, 0
  %v988 = vperm.slane %v981, 1
  %v989 = vperm.slane %v981, 2
  %v990 = vperm.slane %v981, 3
  %v995 = vmul.f32 %v984, %v987
  %v996 = vmul.f32 %v984, %v988
  %v997 = vmul.f32 %v984, %v989
  %v998 = vmul.f32 %v984, %v990
  %v999 = vadd.f32 %v977, %v995
  %v1000 = vadd.f32 %v978, %v996
  %v1001 = vadd.f32 %v979, %v997
  %v1002 = vadd.f32 %v980, %v998
  %1003 = vmatpush.msra.mxu0 %v74
  %1004 = vmatpush.msra.mxu0 %v70
  %1005 = vmatpush.msra.mxu0 %v66
  %1006 = vmatpush.msra.mxu0 %v62
  %1007 = vmatpush.msra.mxu0 %v58
  %1008 = vmatpush.msra.mxu0 %v54
  %1009 = vmatpush.msra.mxu0 %v50
  %1010 = vmatpush.msra.mxu0 %v46
  %1011 = vmatpush.msra.mxu0 %v42
  %1012 = vmatpush.msra.mxu0 %v38
  %1013 = vmatpush.msra.mxu0 %v34
  %1014 = vmatpush.msra.mxu0 %v30
  %1015 = vmatpush.msra.mxu0 %v26
  %1016 = vmatpush.msra.mxu0 %v22
  %1017 = vmatpush.msra.mxu0 %v18
  %1018 = vmatpush.msra.mxu0 %v14
  %1019 = vmatmul.f32.gmra.mxu0 %v923
  %v1020 = vpop.f32.mrf.mxu0
  %v1021 = vadd.f32 0.0, %v1020
  %1022 = vdwg.mxu0
  %1023 = vmatpush.msra.mxu0 %v75
  %1024 = vmatpush.msra.mxu0 %v71
  %1025 = vmatpush.msra.mxu0 %v67
  %1026 = vmatpush.msra.mxu0 %v63
  %1027 = vmatpush.msra.mxu0 %v59
  %1028 = vmatpush.msra.mxu0 %v55
  %1029 = vmatpush.msra.mxu0 %v51
  %1030 = vmatpush.msra.mxu0 %v47
  %1031 = vmatpush.msra.mxu0 %v43
  %1032 = vmatpush.msra.mxu0 %v39
  %1033 = vmatpush.msra.mxu0 %v35
  %1034 = vmatpush.msra.mxu0 %v31
  %1035 = vmatpush.msra.mxu0 %v27
  %1036 = vmatpush.msra.mxu0 %v23
  %1037 = vmatpush.msra.mxu0 %v19
  %1038 = vmatpush.msra.mxu0 %v15
  %1039 = vmatmul.f32.gmra.mxu0 %v923
  %v1040 = vpop.f32.mrf.mxu0
  %v1041 = vadd.f32 0.0, %v1040
  %1042 = vdwg.mxu0
  %1043 = vmatpush.msra.mxu0 %v76
  %1044 = vmatpush.msra.mxu0 %v72
  %1045 = vmatpush.msra.mxu0 %v68
  %1046 = vmatpush.msra.mxu0 %v64
  %1047 = vmatpush.msra.mxu0 %v60
  %1048 = vmatpush.msra.mxu0 %v56
  %1049 = vmatpush.msra.mxu0 %v52
  %1050 = vmatpush.msra.mxu0 %v48
  %1051 = vmatpush.msra.mxu0 %v44
  %1052 = vmatpush.msra.mxu0 %v40
  %1053 = vmatpush.msra.mxu0 %v36
  %1054 = vmatpush.msra.mxu0 %v32
  %1055 = vmatpush.msra.mxu0 %v28
  %1056 = vmatpush.msra.mxu0 %v24
  %1057 = vmatpush.msra.mxu0 %v20
  %1058 = vmatpush.msra.mxu0 %v16
  %1059 = vmatmul.f32.gmra.mxu0 %v923
  %v1060 = vpop.f32.mrf.mxu0
  %v1061 = vadd.f32 0.0, %v1060
  %1062 = vdwg.mxu0
  %1063 = vmatpush.msra.mxu0 %v77
  %1064 = vmatpush.msra.mxu0 %v73
  %1065 = vmatpush.msra.mxu0 %v69
  %1066 = vmatpush.msra.mxu0 %v65
  %1067 = vmatpush.msra.mxu0 %v61
  %1068 = vmatpush.msra.mxu0 %v57
  %1069 = vmatpush.msra.mxu0 %v53
  %1070 = vmatpush.msra.mxu0 %v49
  %1071 = vmatpush.msra.mxu0 %v45
  %1072 = vmatpush.msra.mxu0 %v41
  %1073 = vmatpush.msra.mxu0 %v37
  %1074 = vmatpush.msra.mxu0 %v33
  %1075 = vmatpush.msra.mxu0 %v29
  %1076 = vmatpush.msra.mxu0 %v25
  %1077 = vmatpush.msra.mxu0 %v21
  %1078 = vmatpush.msra.mxu0 %v17
  %1079 = vmatmul.f32.gmra.mxu0 %v923
  %v1080 = vpop.f32.mrf.mxu0
  %v1081 = vadd.f32 0.0, %v1080
  %1082 = vdwg.mxu0
  %v1083 = vadd.f32 %v999, %v1021
  %v1084 = vadd.f32 %v1000, %v1041
  %v1085 = vadd.f32 %v1001, %v1061
  %v1086 = vadd.f32 %v1002, %v1081
  %v1087 = vmul.f32 %v1083, 0.5
  %v1088 = vtanh.pop %v1087
  %v1089 = vmul.f32 %v1088, 0.5
  %v1090 = vadd.f32 %v1089, 0.5
  %v1091 = vmul.f32 %v1084, 0.5
  %v1092 = vtanh.pop %v1091
  %v1093 = vmul.f32 %v1092, 0.5
  %v1094 = vadd.f32 %v1093, 0.5
  %v1095 = vtanh.pop %v1085
  %v1096 = vmul.f32 %v1086, 0.5
  %v1097 = vtanh.pop %v1096
  %v1098 = vmul.f32 %v1097, 0.5
  %v1099 = vadd.f32 %v1098, 0.5
  %v1100 = vmul.f32 %v1094, %v921
  %v1101 = vmul.f32 %v1090, %v1095
  %v1102 = vadd.f32 %v1100, %v1101
  %v1103 = vtanh.pop %v1102
  %v1104 = vmul.f32 %v1099, %v1103
  %1105 = vmatpush.msra.mxu0 %v161
  %1106 = vmatpush.msra.mxu0 %v160
  %1107 = vmatpush.msra.mxu0 %v159
  %1108 = vmatpush.msra.mxu0 %v158
  %1109 = vmatpush.msra.mxu0 %v157
  %1110 = vmatpush.msra.mxu0 %v156
  %1111 = vmatpush.msra.mxu0 %v155
  %1112 = vmatpush.msra.mxu0 %v154
  %1113 = vmatpush.msra.mxu0 %v153
  %1114 = vmatpush.msra.mxu0 %v152
  %1115 = vmatpush.msra.mxu0 %v151
  %1116 = vmatpush.msra.mxu0 %v150
  %1117 = vmatpush.msra.mxu0 %v149
  %1118 = vmatpush.msra.mxu0 %v148
  %1119 = vmatpush.msra.mxu0 %v147
  %1120 = vmatpush.msra.mxu0 %v146
  %1121 = vmatmul.f32.gmra.mxu0 %v1104
  %v1122 = vpop.f32.mrf.mxu0
  %v1123 = vadd.f32 %v145, %v1122
  %1124 = vdwg.mxu0
  %s1125 = scalar_lea.vmem %s3, 12
  %1126 = vst.msk [vmem:[%s1125] sm:$0x3] %vm258, %v1123
  %1127 = vmatpush.msra.mxu0 %v139
  %1128 = vmatpush.msra.mxu0 %v135
  %1129 = vmatpush.msra.mxu0 %v131
  %1130 = vmatpush.msra.mxu0 %v127
  %1131 = vmatpush.msra.mxu0 %v123
  %1132 = vmatpush.msra.mxu0 %v119
  %1133 = vmatpush.msra.mxu0 %v115
  %1134 = vmatpush.msra.mxu0 %v111
  %1135 = vmatpush.msra.mxu0 %v107
  %1136 = vmatpush.msra.mxu0 %v103
  %1137 = vmatpush.msra.mxu0 %v99
  %1138 = vmatpush.msra.mxu0 %v95
  %1139 = vmatpush.msra.mxu0 %v91
  %1140 = vmatpush.msra.mxu0 %v87
  %1141 = vmatpush.msra.mxu0 %v83
  %1142 = vmatpush.msra.mxu0 %v79
  %1143 = vmatmul.f32.gmra.mxu0 %v1104
  %v1144 = vpop.f32.mrf.mxu0
  %v1145 = vadd.f32 0.0, %v1144
  %1146 = vdwg.mxu0
  %1147 = vmatpush.msra.mxu0 %v140
  %1148 = vmatpush.msra.mxu0 %v136
  %1149 = vmatpush.msra.mxu0 %v132
  %1150 = vmatpush.msra.mxu0 %v128
  %1151 = vmatpush.msra.mxu0 %v124
  %1152 = vmatpush.msra.mxu0 %v120
  %1153 = vmatpush.msra.mxu0 %v116
  %1154 = vmatpush.msra.mxu0 %v112
  %1155 = vmatpush.msra.mxu0 %v108
  %1156 = vmatpush.msra.mxu0 %v104
  %1157 = vmatpush.msra.mxu0 %v100
  %1158 = vmatpush.msra.mxu0 %v96
  %1159 = vmatpush.msra.mxu0 %v92
  %1160 = vmatpush.msra.mxu0 %v88
  %1161 = vmatpush.msra.mxu0 %v84
  %1162 = vmatpush.msra.mxu0 %v80
  %1163 = vmatmul.f32.gmra.mxu0 %v1104
  %v1164 = vpop.f32.mrf.mxu0
  %v1165 = vadd.f32 0.0, %v1164
  %1166 = vdwg.mxu0
  %1167 = vmatpush.msra.mxu0 %v141
  %1168 = vmatpush.msra.mxu0 %v137
  %1169 = vmatpush.msra.mxu0 %v133
  %1170 = vmatpush.msra.mxu0 %v129
  %1171 = vmatpush.msra.mxu0 %v125
  %1172 = vmatpush.msra.mxu0 %v121
  %1173 = vmatpush.msra.mxu0 %v117
  %1174 = vmatpush.msra.mxu0 %v113
  %1175 = vmatpush.msra.mxu0 %v109
  %1176 = vmatpush.msra.mxu0 %v105
  %1177 = vmatpush.msra.mxu0 %v101
  %1178 = vmatpush.msra.mxu0 %v97
  %1179 = vmatpush.msra.mxu0 %v93
  %1180 = vmatpush.msra.mxu0 %v89
  %1181 = vmatpush.msra.mxu0 %v85
  %1182 = vmatpush.msra.mxu0 %v81
  %1183 = vmatmul.f32.gmra.mxu0 %v1104
  %v1184 = vpop.f32.mrf.mxu0
  %v1185 = vadd.f32 0.0, %v1184
  %1186 = vdwg.mxu0
  %1187 = vmatpush.msra.mxu0 %v142
  %1188 = vmatpush.msra.mxu0 %v138
  %1189 = vmatpush.msra.mxu0 %v134
  %1190 = vmatpush.msra.mxu0 %v130
  %1191 = vmatpush.msra.mxu0 %v126
  %1192 = vmatpush.msra.mxu0 %v122
  %1193 = vmatpush.msra.mxu0 %v118
  %1194 = vmatpush.msra.mxu0 %v114
  %1195 = vmatpush.msra.mxu0 %v110
  %1196 = vmatpush.msra.mxu0 %v106
  %1197 = vmatpush.msra.mxu0 %v102
  %1198 = vmatpush.msra.mxu0 %v98
  %1199 = vmatpush.msra.mxu0 %v94
  %1200 = vmatpush.msra.mxu0 %v90
  %1201 = vmatpush.msra.mxu0 %v86
  %1202 = vmatpush.msra.mxu0 %v82
  %1203 = vmatmul.f32.gmra.mxu0 %v1104
  %v1204 = vpop.f32.mrf.mxu0
  %v1205 = vadd.f32 0.0, %v1204
  %1206 = vdwg.mxu0
  %v1207 = vadd.f32 %v341, %v1145
  %v1208 = vadd.f32 %v342, %v1165
  %v1209 = vadd.f32 %v343, %v1185
  %v1210 = vadd.f32 %v344, %v1205
  %v1211 = vmul.f32 %v1207, 0.5
  %v1212 = vtanh.pop %v1211
  %v1213 = vmul.f32 %v1212, 0.5
  %v1214 = vadd.f32 %v1213, 0.5
  %v1215 = vmul.f32 %v1208, 0.5
  %v1216 = vtanh.pop %v1215
  %v1217 = vmul.f32 %v1216, 0.5
  %v1218 = vadd.f32 %v1217, 0.5
  %v1219 = vtanh.pop %v1209
  %v1220 = vmul.f32 %v1210, 0.5
  %v1221 = vtanh.pop %v1220
  %v1222 = vmul.f32 %v1221, 0.5
  %v1223 = vadd.f32 %v1222, 0.5
  %v1224 = vmul.f32 %v1218, %v1102
  %v1225 = vmul.f32 %v1214, %v1219
  %v1226 = vadd.f32 %v1224, %v1225
  %v1227 = vtanh.pop %v1226
  %v1228 = vmul.f32 %v1223, %v1227
  %1229 = vmatpush.msra.mxu0 %v161
  %1230 = vmatpush.msra.mxu0 %v160
  %1231 = vmatpush.msra.mxu0 %v159
  %1232 = vmatpush.msra.mxu0 %v158
  %1233 = vmatpush.msra.mxu0 %v157
  %1234 = vmatpush.msra.mxu0 %v156
  %1235 = vmatpush.msra.mxu0 %v155
  %1236 = vmatpush.msra.mxu0 %v154
  %1237 = vmatpush.msra.mxu0 %v153
  %1238 = vmatpush.msra.mxu0 %v152
  %1239 = vmatpush.msra.mxu0 %v151
  %1240 = vmatpush.msra.mxu0 %v150
  %1241 = vmatpush.msra.mxu0 %v149
  %1242 = vmatpush.msra.mxu0 %v148
  %1243 = vmatpush.msra.mxu0 %v147
  %1244 = vmatpush.msra.mxu0 %v146
  %1245 = vmatmul.f32.gmra.mxu0 %v1228
  %v1246 = vpop.f32.mrf.mxu0
  %v1247 = vadd.f32 %v145, %v1246
  %1248 = vdwg.mxu0
  %s1249 = scalar_lea.vmem %s3, 14
  %1250 = vst.msk [vmem:[%s1249] sm:$0x3] %vm258, %v1247
  // Predicated region
  $region14: #{lstm_cell_model_forward.1} parent=0 // pred_check
    _
  $region15: #{lstm_cell_model_forward.1} parent=0 // pred_check_branch
    %1252 = sbr.rel (0) target = $region17
  $region16: #{lstm_cell_model_forward.1} parent=0 // pred_region
    _
  $region17: #{lstm_cell_model_forward.1} parent=0 // pred_fallthru
    _
  // Predicated region
  $region18: #{lstm_cell_model_forward.1} parent=0 // pred_check
    _
  $region19: #{lstm_cell_model_forward.1} parent=0 // pred_check_branch
    %1254 = sbr.rel (0) target = $region21
  $region20: #{lstm_cell_model_forward.1} parent=0 // pred_region
    _
  $region21: #{lstm_cell_model_forward.1} parent=0 // pred_fallthru
    _

</llo_original>
